<compile_context>
chip_gen: v7x
topology: tpu7x:2x2x1
jax: 0.10.0
libtpu: 0.0.40
codegen_flags: <defaults>
</compile_context>

<pallas_src>
import functools

import jax
import jax.numpy as jnp
from jax.experimental import pallas as pl
from jax.experimental.pallas import tpu as pltpu

INPUT_SIZE = 784
NUM_CLASSES = 10
HIDDEN_SIZES = [512, 256, 256, 128]

IN_PAD = 896     # 7 * 128  (784 padded to lane-aligned contraction dim)
OUT_PAD = 128    # 10 padded to a full lane width for unmasked stores
MAX_TM = 256     # batch tile (fills v6e/v7x 256-row MXU; fine on v5e too)


def _round_up(v, m):
    return ((v + m - 1) // m) * m


def _mlp_kernel(x_ref,
                w0_ref, b0_ref,
                w1_ref, b1_ref,
                w2_ref, b2_ref,
                w3_ref, b3_ref,
                w4_ref, b4_ref,
                o_ref):
    """Fused MLP forward on one batch tile: 4x (Linear + ReLU) + final Linear.

    Activations/weights are bf16; accumulation and bias add are f32.
    """

    def layer(h_bf16, w_ref, b_ref, relu):
        acc = jnp.dot(h_bf16, w_ref[...], preferred_element_type=jnp.float32)
        acc = acc + b_ref[...]          # f32 bias add
        if relu:
            acc = jnp.maximum(acc, 0.0)
        return acc

    h = x_ref[...]                                         # (TM, 896) bf16
    h = layer(h, w0_ref, b0_ref, True).astype(jnp.bfloat16)
    h = layer(h, w1_ref, b1_ref, True).astype(jnp.bfloat16)
    h = layer(h, w2_ref, b2_ref, True).astype(jnp.bfloat16)
    h = layer(h, w3_ref, b3_ref, True).astype(jnp.bfloat16)
    out = layer(h, w4_ref, b4_ref, False)                  # (TM, 128) f32
    o_ref[...] = out.astype(o_ref.dtype)


def init_params(key):
    """Deterministic PyTorch-style Linear init (uniform +-1/sqrt(fan_in))."""
    sizes = [INPUT_SIZE] + HIDDEN_SIZES + [NUM_CLASSES]
    params = []
    for i in range(1, len(sizes)):
        fan_in, fan_out = sizes[i - 1], sizes[i]
        key, kw, kb = jax.random.split(key, 3)
        bound = 1.0 / (fan_in ** 0.5)
        w = jax.random.uniform(kw, (fan_in, fan_out), jnp.float32,
                               minval=-bound, maxval=bound)
        b = jax.random.uniform(kb, (1, fan_out), jnp.float32,
                               minval=-bound, maxval=bound)
        params.append((w, b))
    return params


@jax.jit
def base_network_forward(x, params):
    # Flatten like x.view(x.size(0), -1): NCHW -> (B, C*H*W)
    batch = x.shape[0]
    x2d = x.reshape(batch, -1).astype(jnp.float32)
    assert x2d.shape[1] == INPUT_SIZE

    # ---- batch tiling (static; derived from shapes) ----
    padded_rows = _round_up(batch, 8)
    tm = min(MAX_TM, padded_rows)
    padded_rows = _round_up(padded_rows, tm)
    n_tiles = padded_rows // tm

    # ---- pad + cast input: (B, 784) f32 -> (padded_rows, 896) bf16 ----
    x_pad = jnp.zeros((padded_rows, IN_PAD), jnp.bfloat16)
    x_pad = x_pad.at[:batch, :INPUT_SIZE].set(x2d.astype(jnp.bfloat16))

    # ---- prepare resident weights / biases (bf16 weights, f32 biases) ----
    flat_params = []
    param_specs = []
    n_layers = len(params)
    for i, (w, b) in enumerate(params):
        w = w.astype(jnp.float32)
        b = b.astype(jnp.float32).reshape(1, -1)
        if i == 0:
            # zero-pad contraction rows 784 -> 896 (exact: padded x cols are 0)
            w = jnp.pad(w, ((0, IN_PAD - w.shape[0]), (0, 0)))
        if i == n_layers - 1:
            # zero-pad output columns 10 -> 128 for a lane-dense store
            w = jnp.pad(w, ((0, 0), (0, OUT_PAD - w.shape[1])))
            b = jnp.pad(b, ((0, 0), (0, OUT_PAD - b.shape[1])))
        w = w.astype(jnp.bfloat16)
        flat_params += [w, b]
        # Constant index_map -> block revisited every step -> weights stay
        # resident in VMEM (single DMA), only the x/out tiles are streamed.
        param_specs += [pl.BlockSpec(w.shape, lambda i: (0, 0)),
                        pl.BlockSpec(b.shape, lambda i: (0, 0))]

    # ---- cost estimate (helps XLA schedule around the custom call) ----
    dims = [IN_PAD] + HIDDEN_SIZES + [OUT_PAD]
    flops = 2 * padded_rows * sum(dims[i] * dims[i + 1]
                                  for i in range(len(dims) - 1))
    bytes_accessed = (sum(int(a.size) * a.dtype.itemsize for a in flat_params)
                      + padded_rows * IN_PAD * 2      # bf16 input stream
                      + padded_rows * OUT_PAD * 4)    # f32 output stream
    cost = pl.CostEstimate(flops=int(flops), transcendentals=0,
                           bytes_accessed=int(bytes_accessed))

    out = pl.pallas_call(
        _mlp_kernel,
        out_shape=jax.ShapeDtypeStruct((padded_rows, OUT_PAD), jnp.float32),
        grid_spec=pltpu.PrefetchScalarGridSpec(
            num_scalar_prefetch=0,
            grid=(n_tiles,),
            in_specs=[pl.BlockSpec((tm, IN_PAD), lambda i: (i, 0))]
                     + param_specs,
            out_specs=pl.BlockSpec((tm, OUT_PAD), lambda i: (i, 0)),
        ),
        compiler_params=pltpu.CompilerParams(
            dimension_semantics=("parallel",),   # shard batch tiles across TCs
        ),
        cost_estimate=cost,
    )(x_pad, *flat_params)

    # strip batch padding and the lane padding of the logits
    return out[:batch, :NUM_CLASSES]


def _reference_forward(x, params):
    """Pure-JAX reference emulating the kernel's bf16 operands / f32 accum."""
    h = x.reshape(x.shape[0], -1).astype(jnp.float32)
    for i, (w, b) in enumerate(params):
        h = jnp.dot(h.astype(jnp.bfloat16), w.astype(jnp.bfloat16),
                    preferred_element_type=jnp.float32) + b.reshape(1, -1)
        if i < len(params) - 1:
            h = jnp.maximum(h, 0.0)
    return h


if __name__ == "__main__":
    key = jax.random.PRNGKey(0)
    key_x, key_p = jax.random.split(key)

    # Small deterministic input consistent with input_size=784 (28x28, NCHW)
    x = jax.random.normal(key_x, (2, 1, 28, 28), dtype=jnp.float32)
    params = init_params(key_p)

    out = base_network_forward(x, params)
    jax.block_until_ready(out)

    ref = _reference_forward(x, params)
    assert out.shape == (2, NUM_CLASSES)
    assert jnp.allclose(out, ref, atol=2e-3, rtol=2e-3), "mismatch vs reference"

    print("KERNEL_OK")
</pallas_src>

<mosaic_0001>
module attributes {stable_mosaic.version = 11 : i64} {
  func.func @_mlp_kernel(%arg0: i32, %arg1: memref<8x896xbf16, #tpu.memory_space<vmem>>, %arg2: memref<896x512xbf16, #tpu.memory_space<vmem>>, %arg3: memref<1x512xf32, #tpu.memory_space<vmem>>, %arg4: memref<512x256xbf16, #tpu.memory_space<vmem>>, %arg5: memref<1x256xf32, #tpu.memory_space<vmem>>, %arg6: memref<256x256xbf16, #tpu.memory_space<vmem>>, %arg7: memref<1x256xf32, #tpu.memory_space<vmem>>, %arg8: memref<256x128xbf16, #tpu.memory_space<vmem>>, %arg9: memref<1x128xf32, #tpu.memory_space<vmem>>, %arg10: memref<128x128xbf16, #tpu.memory_space<vmem>>, %arg11: memref<1x128xf32, #tpu.memory_space<vmem>>, %arg12: memref<8x128xf32, #tpu.memory_space<vmem>>) attributes {dimension_semantics = [#tpu.dimension_semantics<parallel>], iteration_bounds = array<i64: 1>, scalar_prefetch = 0 : i64, scratch_operands = 0 : i64, tpu.core_type = #tpu.core_type<tc>, window_params = [{transform_indices = @transform_0, window_bounds = array<i64: 8, 896>}, {pipeline_mode = #tpu.pipeline_mode<synchronous>, transform_indices = @transform_1, window_bounds = array<i64: 896, 512>}, {pipeline_mode = #tpu.pipeline_mode<synchronous>, transform_indices = @transform_2, window_bounds = array<i64: 1, 512>}, {pipeline_mode = #tpu.pipeline_mode<synchronous>, transform_indices = @transform_3, window_bounds = array<i64: 512, 256>}, {pipeline_mode = #tpu.pipeline_mode<synchronous>, transform_indices = @transform_4, window_bounds = array<i64: 1, 256>}, {pipeline_mode = #tpu.pipeline_mode<synchronous>, transform_indices = @transform_5, window_bounds = array<i64: 256, 256>}, {pipeline_mode = #tpu.pipeline_mode<synchronous>, transform_indices = @transform_6, window_bounds = array<i64: 1, 256>}, {pipeline_mode = #tpu.pipeline_mode<synchronous>, transform_indices = @transform_7, window_bounds = array<i64: 256, 128>}, {pipeline_mode = #tpu.pipeline_mode<synchronous>, transform_indices = @transform_8, window_bounds = array<i64: 1, 128>}, {pipeline_mode = #tpu.pipeline_mode<synchronous>, transform_indices = @transform_9, window_bounds = array<i64: 128, 128>}, {pipeline_mode = #tpu.pipeline_mode<synchronous>, transform_indices = @transform_10, window_bounds = array<i64: 1, 128>}, {transform_indices = @transform_11, window_bounds = array<i64: 8, 128>}]} {
    %c0 = arith.constant 0 : index
    %c0_0 = arith.constant 0 : index
    %0 = vector.load %arg1[%c0, %c0_0] : memref<8x896xbf16, #tpu.memory_space<vmem>>, vector<8x896xbf16>
    %c0_1 = arith.constant 0 : index
    %c0_2 = arith.constant 0 : index
    %1 = vector.load %arg2[%c0_1, %c0_2] : memref<896x512xbf16, #tpu.memory_space<vmem>>, vector<896x512xbf16>
    %cst = arith.constant dense<0.000000e+00> : vector<8x512xf32>
    %2 = tpu.matmul %0, %1, %cst {dimension_numbers = #tpu.dot_dimension_numbers<[1], [0], [0], [1], [0, 0, 1, 1], [], []>} : vector<8x896xbf16>, vector<896x512xbf16>, vector<8x512xf32> -> vector<8x512xf32>
    %c0_3 = arith.constant 0 : index
    %c0_4 = arith.constant 0 : index
    %3 = vector.load %arg3[%c0_3, %c0_4] : memref<1x512xf32, #tpu.memory_space<vmem>>, vector<1x512xf32>
    %4 = vector.broadcast %3 : vector<1x512xf32> to vector<8x512xf32>
    %5 = arith.addf %2, %4 : vector<8x512xf32>
    %cst_5 = arith.constant 0.000000e+00 : f32
    %6 = vector.broadcast %cst_5 : f32 to vector<8x512xf32>
    %7 = arith.maximumf %5, %6 : vector<8x512xf32>
    %8 = arith.truncf %7 : vector<8x512xf32> to vector<8x512xbf16>
    %c0_6 = arith.constant 0 : index
    %c0_7 = arith.constant 0 : index
    %9 = vector.load %arg4[%c0_6, %c0_7] : memref<512x256xbf16, #tpu.memory_space<vmem>>, vector<512x256xbf16>
    %cst_8 = arith.constant dense<0.000000e+00> : vector<8x256xf32>
    %10 = tpu.matmul %8, %9, %cst_8 {dimension_numbers = #tpu.dot_dimension_numbers<[1], [0], [0], [1], [0, 0, 1, 1], [], []>} : vector<8x512xbf16>, vector<512x256xbf16>, vector<8x256xf32> -> vector<8x256xf32>
    %c0_9 = arith.constant 0 : index
    %c0_10 = arith.constant 0 : index
    %11 = vector.load %arg5[%c0_9, %c0_10] : memref<1x256xf32, #tpu.memory_space<vmem>>, vector<1x256xf32>
    %12 = vector.broadcast %11 : vector<1x256xf32> to vector<8x256xf32>
    %13 = arith.addf %10, %12 : vector<8x256xf32>
    %cst_11 = arith.constant 0.000000e+00 : f32
    %14 = vector.broadcast %cst_11 : f32 to vector<8x256xf32>
    %15 = arith.maximumf %13, %14 : vector<8x256xf32>
    %16 = arith.truncf %15 : vector<8x256xf32> to vector<8x256xbf16>
    %c0_12 = arith.constant 0 : index
    %c0_13 = arith.constant 0 : index
    %17 = vector.load %arg6[%c0_12, %c0_13] : memref<256x256xbf16, #tpu.memory_space<vmem>>, vector<256x256xbf16>
    %cst_14 = arith.constant dense<0.000000e+00> : vector<8x256xf32>
    %18 = tpu.matmul %16, %17, %cst_14 {dimension_numbers = #tpu.dot_dimension_numbers<[1], [0], [0], [1], [0, 0, 1, 1], [], []>} : vector<8x256xbf16>, vector<256x256xbf16>, vector<8x256xf32> -> vector<8x256xf32>
    %c0_15 = arith.constant 0 : index
    %c0_16 = arith.constant 0 : index
    %19 = vector.load %arg7[%c0_15, %c0_16] : memref<1x256xf32, #tpu.memory_space<vmem>>, vector<1x256xf32>
    %20 = vector.broadcast %19 : vector<1x256xf32> to vector<8x256xf32>
    %21 = arith.addf %18, %20 : vector<8x256xf32>
    %cst_17 = arith.constant 0.000000e+00 : f32
    %22 = vector.broadcast %cst_17 : f32 to vector<8x256xf32>
    %23 = arith.maximumf %21, %22 : vector<8x256xf32>
    %24 = arith.truncf %23 : vector<8x256xf32> to vector<8x256xbf16>
    %c0_18 = arith.constant 0 : index
    %c0_19 = arith.constant 0 : index
    %25 = vector.load %arg8[%c0_18, %c0_19] : memref<256x128xbf16, #tpu.memory_space<vmem>>, vector<256x128xbf16>
    %cst_20 = arith.constant dense<0.000000e+00> : vector<8x128xf32>
    %26 = tpu.matmul %24, %25, %cst_20 {dimension_numbers = #tpu.dot_dimension_numbers<[1], [0], [0], [1], [0, 0, 1, 1], [], []>} : vector<8x256xbf16>, vector<256x128xbf16>, vector<8x128xf32> -> vector<8x128xf32>
    %c0_21 = arith.constant 0 : index
    %c0_22 = arith.constant 0 : index
    %27 = vector.load %arg9[%c0_21, %c0_22] : memref<1x128xf32, #tpu.memory_space<vmem>>, vector<1x128xf32>
    %28 = vector.broadcast %27 : vector<1x128xf32> to vector<8x128xf32>
    %29 = arith.addf %26, %28 : vector<8x128xf32>
    %cst_23 = arith.constant 0.000000e+00 : f32
    %30 = vector.broadcast %cst_23 : f32 to vector<8x128xf32>
    %31 = arith.maximumf %29, %30 : vector<8x128xf32>
    %32 = arith.truncf %31 : vector<8x128xf32> to vector<8x128xbf16>
    %c0_24 = arith.constant 0 : index
    %c0_25 = arith.constant 0 : index
    %33 = vector.load %arg10[%c0_24, %c0_25] : memref<128x128xbf16, #tpu.memory_space<vmem>>, vector<128x128xbf16>
    %cst_26 = arith.constant dense<0.000000e+00> : vector<8x128xf32>
    %34 = tpu.matmul %32, %33, %cst_26 {dimension_numbers = #tpu.dot_dimension_numbers<[1], [0], [0], [1], [0, 0, 1, 1], [], []>} : vector<8x128xbf16>, vector<128x128xbf16>, vector<8x128xf32> -> vector<8x128xf32>
    %c0_27 = arith.constant 0 : index
    %c0_28 = arith.constant 0 : index
    %35 = vector.load %arg11[%c0_27, %c0_28] : memref<1x128xf32, #tpu.memory_space<vmem>>, vector<1x128xf32>
    %36 = vector.broadcast %35 : vector<1x128xf32> to vector<8x128xf32>
    %37 = arith.addf %34, %36 : vector<8x128xf32>
    %c0_29 = arith.constant 0 : index
    %c0_30 = arith.constant 0 : index
    %38 = vector.load %arg12[%c0_29, %c0_30] : memref<8x128xf32, #tpu.memory_space<vmem>>, vector<8x128xf32>
    tpu.vector_store %arg12[%c0_29, %c0_30], %37 {strides = array<i32>} : memref<8x128xf32, #tpu.memory_space<vmem>>, vector<8x128xf32>,
    return
  }
  func.func @transform_0(%arg0: i32) -> (i32, i32) {
    %c0_i32 = arith.constant 0 : i32
    %c0_i32_0 = arith.constant 0 : i32
    return %arg0, %c0_i32 : i32, i32
  }
  func.func @transform_1(%arg0: i32) -> (i32, i32) {
    %c0_i32 = arith.constant 0 : i32
    %c0_i32_0 = arith.constant 0 : i32
    %c0_i32_1 = arith.constant 0 : i32
    return %c0_i32, %c0_i32_0 : i32, i32
  }
  func.func @transform_2(%arg0: i32) -> (i32, i32) {
    %c0_i32 = arith.constant 0 : i32
    %c0_i32_0 = arith.constant 0 : i32
    %c0_i32_1 = arith.constant 0 : i32
    return %c0_i32, %c0_i32_0 : i32, i32
  }
  func.func @transform_3(%arg0: i32) -> (i32, i32) {
    %c0_i32 = arith.constant 0 : i32
    %c0_i32_0 = arith.constant 0 : i32
    %c0_i32_1 = arith.constant 0 : i32
    return %c0_i32, %c0_i32_0 : i32, i32
  }
  func.func @transform_4(%arg0: i32) -> (i32, i32) {
    %c0_i32 = arith.constant 0 : i32
    %c0_i32_0 = arith.constant 0 : i32
    %c0_i32_1 = arith.constant 0 : i32
    return %c0_i32, %c0_i32_0 : i32, i32
  }
  func.func @transform_5(%arg0: i32) -> (i32, i32) {
    %c0_i32 = arith.constant 0 : i32
    %c0_i32_0 = arith.constant 0 : i32
    %c0_i32_1 = arith.constant 0 : i32
    return %c0_i32, %c0_i32_0 : i32, i32
  }
  func.func @transform_6(%arg0: i32) -> (i32, i32) {
    %c0_i32 = arith.constant 0 : i32
    %c0_i32_0 = arith.constant 0 : i32
    %c0_i32_1 = arith.constant 0 : i32
    return %c0_i32, %c0_i32_0 : i32, i32
  }
  func.func @transform_7(%arg0: i32) -> (i32, i32) {
    %c0_i32 = arith.constant 0 : i32
    %c0_i32_0 = arith.constant 0 : i32
    %c0_i32_1 = arith.constant 0 : i32
    return %c0_i32, %c0_i32_0 : i32, i32
  }
  func.func @transform_8(%arg0: i32) -> (i32, i32) {
    %c0_i32 = arith.constant 0 : i32
    %c0_i32_0 = arith.constant 0 : i32
    %c0_i32_1 = arith.constant 0 : i32
    return %c0_i32, %c0_i32_0 : i32, i32
  }
  func.func @transform_9(%arg0: i32) -> (i32, i32) {
    %c0_i32 = arith.constant 0 : i32
    %c0_i32_0 = arith.constant 0 : i32
    %c0_i32_1 = arith.constant 0 : i32
    return %c0_i32, %c0_i32_0 : i32, i32
  }
  func.func @transform_10(%arg0: i32) -> (i32, i32) {
    %c0_i32 = arith.constant 0 : i32
    %c0_i32_0 = arith.constant 0 : i32
    %c0_i32_1 = arith.constant 0 : i32
    return %c0_i32, %c0_i32_0 : i32, i32
  }
  func.func @transform_11(%arg0: i32) -> (i32, i32) {
    %c0_i32 = arith.constant 0 : i32
    %c0_i32_0 = arith.constant 0 : i32
    return %arg0, %c0_i32 : i32, i32
  }
}

</mosaic_0001>

<llo_original>
// kernel: base_network_forward.1
$region0: #{base_network_forward.1}
  #allocation0 [shape = 'u32[]', space=smem, size = 0x4, offset = 0x4, fixed_abs, tag = 'smem constant byte address 0x4 - core index']
  #allocation1 [shape = 'u32[144,128]{1,0:T(1,128)}', space=vmem, size = 0x12000, scoped, tag = 'internal scratch']
  %s0 = inlined_call_operand.vmem [shape: bf16[8,896], index: 0, kind: input, shape index: {}]
  %s1 = inlined_call_operand.vmem [shape: bf16[896,512], index: 1, kind: input, shape index: {}]
  %s2 = inlined_call_operand.vmem [shape: f32[1,512], index: 2, kind: input, shape index: {}]
  %s3 = inlined_call_operand.vmem [shape: bf16[512,256], index: 3, kind: input, shape index: {}]
  %s4 = inlined_call_operand.vmem [shape: f32[1,256], index: 4, kind: input, shape index: {}]
  %s5 = inlined_call_operand.vmem [shape: bf16[256,256], index: 5, kind: input, shape index: {}]
  %s6 = inlined_call_operand.vmem [shape: f32[1,256], index: 6, kind: input, shape index: {}]
  %s7 = inlined_call_operand.vmem [shape: bf16[256,128], index: 7, kind: input, shape index: {}]
  %s8 = inlined_call_operand.vmem [shape: f32[1,128], index: 8, kind: input, shape index: {}]
  %s9 = inlined_call_operand.vmem [shape: bf16[128,128], index: 9, kind: input, shape index: {}]
  %s10 = inlined_call_operand.vmem [shape: f32[1,128], index: 10, kind: input, shape index: {}]
  %s11 = inlined_call_operand.vmem [shape: f32[8,128], index: 11, kind: output, shape index: {}]
  %s12 = sld [smem:[#allocation0]]
  $region54: #{base_network_forward.1} parent=0
    _
  %s14 = ssub.s32 1, %s12
  %s15 = scalar_select 0, %s14, %s12
  // Predicated region
  $region2: #{base_network_forward.1} parent=0 // pred_check
    _
  $region3: #{base_network_forward.1} parent=0 // pred_check_branch
    %17 = sbr.rel (0) target = $region5
  $region4: #{base_network_forward.1} parent=0 // pred_region
    _
  $region5: #{base_network_forward.1} parent=0 // pred_fallthru
    _
  // Predicated region
  $region6: #{base_network_forward.1} parent=0 // pred_check
    _
  $region7: #{base_network_forward.1} parent=0 // pred_check_branch
    %19 = sbr.rel (0) target = $region9
  $region8: #{base_network_forward.1} parent=0 // pred_region
    _
  $region9: #{base_network_forward.1} parent=0 // pred_fallthru
    _
  // Predicated region
  $region10: #{base_network_forward.1} parent=0 // pred_check
    _
  $region11: #{base_network_forward.1} parent=0 // pred_check_branch
    %21 = sbr.rel (0) target = $region13
  $region12: #{base_network_forward.1} parent=0 // pred_region
    _
  $region13: #{base_network_forward.1} parent=0 // pred_fallthru
    _
  // Predicated region
  $region14: #{base_network_forward.1} parent=0 // pred_check
    _
  $region15: #{base_network_forward.1} parent=0 // pred_check_branch
    %23 = sbr.rel (0) target = $region17
  $region16: #{base_network_forward.1} parent=0 // pred_region
    _
  $region17: #{base_network_forward.1} parent=0 // pred_fallthru
    _
  // Predicated region
  $region18: #{base_network_forward.1} parent=0 // pred_check
    _
  $region19: #{base_network_forward.1} parent=0 // pred_check_branch
    %25 = sbr.rel (0) target = $region21
  $region20: #{base_network_forward.1} parent=0 // pred_region
    _
  $region21: #{base_network_forward.1} parent=0 // pred_fallthru
    _
  // Predicated region
  $region22: #{base_network_forward.1} parent=0 // pred_check
    _
  $region23: #{base_network_forward.1} parent=0 // pred_check_branch
    %27 = sbr.rel (0) target = $region25
  $region24: #{base_network_forward.1} parent=0 // pred_region
    _
  $region25: #{base_network_forward.1} parent=0 // pred_fallthru
    _
  // Predicated region
  $region26: #{base_network_forward.1} parent=0 // pred_check
    _
  $region27: #{base_network_forward.1} parent=0 // pred_check_branch
    %29 = sbr.rel (0) target = $region29
  $region28: #{base_network_forward.1} parent=0 // pred_region
    _
  $region29: #{base_network_forward.1} parent=0 // pred_fallthru
    _
  // Predicated region
  $region30: #{base_network_forward.1} parent=0 // pred_check
    _
  $region31: #{base_network_forward.1} parent=0 // pred_check_branch
    %31 = sbr.rel (0) target = $region33
  $region32: #{base_network_forward.1} parent=0 // pred_region
    _
  $region33: #{base_network_forward.1} parent=0 // pred_fallthru
    _
  // Predicated region
  $region34: #{base_network_forward.1} parent=0 // pred_check
    _
  $region35: #{base_network_forward.1} parent=0 // pred_check_branch
    %33 = sbr.rel (0) target = $region37
  $region36: #{base_network_forward.1} parent=0 // pred_region
    _
  $region37: #{base_network_forward.1} parent=0 // pred_fallthru
    _
  // Predicated region
  $region38: #{base_network_forward.1} parent=0 // pred_check
    _
  $region39: #{base_network_forward.1} parent=0 // pred_check_branch
    %35 = sbr.rel (0) target = $region41
  $region40: #{base_network_forward.1} parent=0 // pred_region
    _
  $region41: #{base_network_forward.1} parent=0 // pred_fallthru
    _
  // Predicated region
  $region42: #{base_network_forward.1} parent=0 // pred_check
    _
  $region43: #{base_network_forward.1} parent=0 // pred_check_branch
    %37 = sbr.rel (0) target = $region45
  $region44: #{base_network_forward.1} parent=0 // pred_region
    _
  $region45: #{base_network_forward.1} parent=0 // pred_fallthru
    _
  %v39 = vld [vmem:[%s0] sm:$0xff]
  %v40 = vld [vmem:[%s0 + $0x8] sm:$0xff]
  %v41 = vld [vmem:[%s0 + $0x10] sm:$0xff]
  %v42 = vld [vmem:[%s0 + $0x18] sm:$0xf]
  %v43 = vld [vmem:[%s1] sm:$0xff]
  %v44 = vld [vmem:[%s1 + $0x8] sm:$0xff]
  %v45 = vld [vmem:[%s1 + $0x10] sm:$0xff]
  %v46 = vld [vmem:[%s1 + $0x18] sm:$0xff]
  %v47 = vld [vmem:[%s1 + $0x20] sm:$0xff]
  %v48 = vld [vmem:[%s1 + $0x28] sm:$0xff]
  %v49 = vld [vmem:[%s1 + $0x30] sm:$0xff]
  %v50 = vld [vmem:[%s1 + $0x38] sm:$0xff]
  %v51 = vld [vmem:[%s1 + $0x40] sm:$0xff]
  %v52 = vld [vmem:[%s1 + $0x48] sm:$0xff]
  %v53 = vld [vmem:[%s1 + $0x50] sm:$0xff]
  %v54 = vld [vmem:[%s1 + $0x58] sm:$0xff]
  %v55 = vld [vmem:[%s1 + $0x60] sm:$0xff]
  %v56 = vld [vmem:[%s1 + $0x68] sm:$0xff]
  %v57 = vld [vmem:[%s1 + $0x70] sm:$0xff]
  %v58 = vld [vmem:[%s1 + $0x78] sm:$0xff]
  %v59 = vld [vmem:[%s1 + $0x80] sm:$0xff]
  %v60 = vld [vmem:[%s1 + $0x88] sm:$0xff]
  %v61 = vld [vmem:[%s1 + $0x90] sm:$0xff]
  %v62 = vld [vmem:[%s1 + $0x98] sm:$0xff]
  %v63 = vld [vmem:[%s1 + $0xa0] sm:$0xff]
  %v64 = vld [vmem:[%s1 + $0xa8] sm:$0xff]
  %v65 = vld [vmem:[%s1 + $0xb0] sm:$0xff]
  %v66 = vld [vmem:[%s1 + $0xb8] sm:$0xff]
  %v67 = vld [vmem:[%s1 + $0xc0] sm:$0xff]
  %v68 = vld [vmem:[%s1 + $0xc8] sm:$0xff]
  %v69 = vld [vmem:[%s1 + $0xd0] sm:$0xff]
  %v70 = vld [vmem:[%s1 + $0xd8] sm:$0xff]
  %v71 = vld [vmem:[%s1 + $0xe0] sm:$0xff]
  %v72 = vld [vmem:[%s1 + $0xe8] sm:$0xff]
  %v73 = vld [vmem:[%s1 + $0xf0] sm:$0xff]
  %v74 = vld [vmem:[%s1 + $0xf8] sm:$0xff]
  %v75 = vld [vmem:[%s1 + $0x100] sm:$0xff]
  %v76 = vld [vmem:[%s1 + $0x108] sm:$0xff]
  %v77 = vld [vmem:[%s1 + $0x110] sm:$0xff]
  %v78 = vld [vmem:[%s1 + $0x118] sm:$0xff]
  %v79 = vld [vmem:[%s1 + $0x120] sm:$0xff]
  %v80 = vld [vmem:[%s1 + $0x128] sm:$0xff]
  %v81 = vld [vmem:[%s1 + $0x130] sm:$0xff]
  %v82 = vld [vmem:[%s1 + $0x138] sm:$0xff]
  %v83 = vld [vmem:[%s1 + $0x140] sm:$0xff]
  %v84 = vld [vmem:[%s1 + $0x148] sm:$0xff]
  %v85 = vld [vmem:[%s1 + $0x150] sm:$0xff]
  %v86 = vld [vmem:[%s1 + $0x158] sm:$0xff]
  %v87 = vld [vmem:[%s1 + $0x160] sm:$0xff]
  %v88 = vld [vmem:[%s1 + $0x168] sm:$0xff]
  %v89 = vld [vmem:[%s1 + $0x170] sm:$0xff]
  %v90 = vld [vmem:[%s1 + $0x178] sm:$0xff]
  %v91 = vld [vmem:[%s1 + $0x180] sm:$0xff]
  %v92 = vld [vmem:[%s1 + $0x188] sm:$0xff]
  %v93 = vld [vmem:[%s1 + $0x190] sm:$0xff]
  %v94 = vld [vmem:[%s1 + $0x198] sm:$0xff]
  %v95 = vld [vmem:[%s1 + $0x1a0] sm:$0xff]
  %v96 = vld [vmem:[%s1 + $0x1a8] sm:$0xff]
  %v97 = vld [vmem:[%s1 + $0x1b0] sm:$0xff]
  %v98 = vld [vmem:[%s1 + $0x1b8] sm:$0xff]
  %v99 = vld [vmem:[%s1 + $0x1c0] sm:$0xff]
  %v100 = vld [vmem:[%s1 + $0x1c8] sm:$0xff]
  %v101 = vld [vmem:[%s1 + $0x1d0] sm:$0xff]
  %v102 = vld [vmem:[%s1 + $0x1d8] sm:$0xff]
  %v103 = vld [vmem:[%s1 + $0x1e0] sm:$0xff]
  %v104 = vld [vmem:[%s1 + $0x1e8] sm:$0xff]
  %v105 = vld [vmem:[%s1 + $0x1f0] sm:$0xff]
  %v106 = vld [vmem:[%s1 + $0x1f8] sm:$0xff]
  %v107 = vld [vmem:[%s1 + $0x200] sm:$0xff]
  %v108 = vld [vmem:[%s1 + $0x208] sm:$0xff]
  %v109 = vld [vmem:[%s1 + $0x210] sm:$0xff]
  %v110 = vld [vmem:[%s1 + $0x218] sm:$0xff]
  %v111 = vld [vmem:[%s1 + $0x220] sm:$0xff]
  %v112 = vld [vmem:[%s1 + $0x228] sm:$0xff]
  %v113 = vld [vmem:[%s1 + $0x230] sm:$0xff]
  %v114 = vld [vmem:[%s1 + $0x238] sm:$0xff]
  %v115 = vld [vmem:[%s1 + $0x240] sm:$0xff]
  %v116 = vld [vmem:[%s1 + $0x248] sm:$0xff]
  %v117 = vld [vmem:[%s1 + $0x250] sm:$0xff]
  %v118 = vld [vmem:[%s1 + $0x258] sm:$0xff]
  %v119 = vld [vmem:[%s1 + $0x260] sm:$0xff]
  %v120 = vld [vmem:[%s1 + $0x268] sm:$0xff]
  %v121 = vld [vmem:[%s1 + $0x270] sm:$0xff]
  %v122 = vld [vmem:[%s1 + $0x278] sm:$0xff]
  %v123 = vld [vmem:[%s1 + $0x280] sm:$0xff]
  %v124 = vld [vmem:[%s1 + $0x288] sm:$0xff]
  %v125 = vld [vmem:[%s1 + $0x290] sm:$0xff]
  %v126 = vld [vmem:[%s1 + $0x298] sm:$0xff]
  %v127 = vld [vmem:[%s1 + $0x2a0] sm:$0xff]
  %v128 = vld [vmem:[%s1 + $0x2a8] sm:$0xff]
  %v129 = vld [vmem:[%s1 + $0x2b0] sm:$0xff]
  %v130 = vld [vmem:[%s1 + $0x2b8] sm:$0xff]
  %v131 = vld [vmem:[%s1 + $0x2c0] sm:$0xff]
  %v132 = vld [vmem:[%s1 + $0x2c8] sm:$0xff]
  %v133 = vld [vmem:[%s1 + $0x2d0] sm:$0xff]
  %v134 = vld [vmem:[%s1 + $0x2d8] sm:$0xff]
  %v135 = vld [vmem:[%s1 + $0x2e0] sm:$0xff]
  %v136 = vld [vmem:[%s1 + $0x2e8] sm:$0xff]
  %v137 = vld [vmem:[%s1 + $0x2f0] sm:$0xff]
  %v138 = vld [vmem:[%s1 + $0x2f8] sm:$0xff]
  %v139 = vld [vmem:[%s1 + $0x300] sm:$0xff]
  %v140 = vld [vmem:[%s1 + $0x308] sm:$0xff]
  %v141 = vld [vmem:[%s1 + $0x310] sm:$0xff]
  %v142 = vld [vmem:[%s1 + $0x318] sm:$0xff]
  %v143 = vld [vmem:[%s1 + $0x320] sm:$0xff]
  %v144 = vld [vmem:[%s1 + $0x328] sm:$0xff]
  %v145 = vld [vmem:[%s1 + $0x330] sm:$0xff]
  %v146 = vld [vmem:[%s1 + $0x338] sm:$0xff]
  %v147 = vld [vmem:[%s1 + $0x340] sm:$0xff]
  %v148 = vld [vmem:[%s1 + $0x348] sm:$0xff]
  %v149 = vld [vmem:[%s1 + $0x350] sm:$0xff]
  %v150 = vld [vmem:[%s1 + $0x358] sm:$0xff]
  %v151 = vld [vmem:[%s1 + $0x360] sm:$0xff]
  %v152 = vld [vmem:[%s1 + $0x368] sm:$0xff]
  %v153 = vld [vmem:[%s1 + $0x370] sm:$0xff]
  %v154 = vld [vmem:[%s1 + $0x378] sm:$0xff]
  %v155 = vld [vmem:[%s1 + $0x380] sm:$0xff]
  %v156 = vld [vmem:[%s1 + $0x388] sm:$0xff]
  %v157 = vld [vmem:[%s1 + $0x390] sm:$0xff]
  %v158 = vld [vmem:[%s1 + $0x398] sm:$0xff]
  %v159 = vld [vmem:[%s1 + $0x3a0] sm:$0xff]
  %v160 = vld [vmem:[%s1 + $0x3a8] sm:$0xff]
  %v161 = vld [vmem:[%s1 + $0x3b0] sm:$0xff]
  %v162 = vld [vmem:[%s1 + $0x3b8] sm:$0xff]
  %v163 = vld [vmem:[%s1 + $0x3c0] sm:$0xff]
  %v164 = vld [vmem:[%s1 + $0x3c8] sm:$0xff]
  %v165 = vld [vmem:[%s1 + $0x3d0] sm:$0xff]
  %v166 = vld [vmem:[%s1 + $0x3d8] sm:$0xff]
  %v167 = vld [vmem:[%s1 + $0x3e0] sm:$0xff]
  %v168 = vld [vmem:[%s1 + $0x3e8] sm:$0xff]
  %v169 = vld [vmem:[%s1 + $0x3f0] sm:$0xff]
  %v170 = vld [vmem:[%s1 + $0x3f8] sm:$0xff]
  %v171 = vld [vmem:[%s1 + $0x400] sm:$0xff]
  %v172 = vld [vmem:[%s1 + $0x408] sm:$0xff]
  %v173 = vld [vmem:[%s1 + $0x410] sm:$0xff]
  %v174 = vld [vmem:[%s1 + $0x418] sm:$0xff]
  %v175 = vld [vmem:[%s1 + $0x420] sm:$0xff]
  %v176 = vld [vmem:[%s1 + $0x428] sm:$0xff]
  %v177 = vld [vmem:[%s1 + $0x430] sm:$0xff]
  %v178 = vld [vmem:[%s1 + $0x438] sm:$0xff]
  %v179 = vld [vmem:[%s1 + $0x440] sm:$0xff]
  %v180 = vld [vmem:[%s1 + $0x448] sm:$0xff]
  %v181 = vld [vmem:[%s1 + $0x450] sm:$0xff]
  %v182 = vld [vmem:[%s1 + $0x458] sm:$0xff]
  %v183 = vld [vmem:[%s1 + $0x460] sm:$0xff]
  %v184 = vld [vmem:[%s1 + $0x468] sm:$0xff]
  %v185 = vld [vmem:[%s1 + $0x470] sm:$0xff]
  %v186 = vld [vmem:[%s1 + $0x478] sm:$0xff]
  %v187 = vld [vmem:[%s1 + $0x480] sm:$0xff]
  %v188 = vld [vmem:[%s1 + $0x488] sm:$0xff]
  %v189 = vld [vmem:[%s1 + $0x490] sm:$0xff]
  %v190 = vld [vmem:[%s1 + $0x498] sm:$0xff]
  %v191 = vld [vmem:[%s1 + $0x4a0] sm:$0xff]
  %v192 = vld [vmem:[%s1 + $0x4a8] sm:$0xff]
  %v193 = vld [vmem:[%s1 + $0x4b0] sm:$0xff]
  %v194 = vld [vmem:[%s1 + $0x4b8] sm:$0xff]
  %v195 = vld [vmem:[%s1 + $0x4c0] sm:$0xff]
  %v196 = vld [vmem:[%s1 + $0x4c8] sm:$0xff]
  %v197 = vld [vmem:[%s1 + $0x4d0] sm:$0xff]
  %v198 = vld [vmem:[%s1 + $0x4d8] sm:$0xff]
  %v199 = vld [vmem:[%s1 + $0x4e0] sm:$0xff]
  %v200 = vld [vmem:[%s1 + $0x4e8] sm:$0xff]
  %v201 = vld [vmem:[%s1 + $0x4f0] sm:$0xff]
  %v202 = vld [vmem:[%s1 + $0x4f8] sm:$0xff]
  %v203 = vld [vmem:[%s1 + $0x500] sm:$0xff]
  %v204 = vld [vmem:[%s1 + $0x508] sm:$0xff]
  %v205 = vld [vmem:[%s1 + $0x510] sm:$0xff]
  %v206 = vld [vmem:[%s1 + $0x518] sm:$0xff]
  %v207 = vld [vmem:[%s1 + $0x520] sm:$0xff]
  %v208 = vld [vmem:[%s1 + $0x528] sm:$0xff]
  %v209 = vld [vmem:[%s1 + $0x530] sm:$0xff]
  %v210 = vld [vmem:[%s1 + $0x538] sm:$0xff]
  %v211 = vld [vmem:[%s1 + $0x540] sm:$0xff]
  %v212 = vld [vmem:[%s1 + $0x548] sm:$0xff]
  %v213 = vld [vmem:[%s1 + $0x550] sm:$0xff]
  %v214 = vld [vmem:[%s1 + $0x558] sm:$0xff]
  %v215 = vld [vmem:[%s1 + $0x560] sm:$0xff]
  %v216 = vld [vmem:[%s1 + $0x568] sm:$0xff]
  %v217 = vld [vmem:[%s1 + $0x570] sm:$0xff]
  %v218 = vld [vmem:[%s1 + $0x578] sm:$0xff]
  %v219 = vld [vmem:[%s1 + $0x580] sm:$0xff]
  %v220 = vld [vmem:[%s1 + $0x588] sm:$0xff]
  %v221 = vld [vmem:[%s1 + $0x590] sm:$0xff]
  %v222 = vld [vmem:[%s1 + $0x598] sm:$0xff]
  %v223 = vld [vmem:[%s1 + $0x5a0] sm:$0xff]
  %v224 = vld [vmem:[%s1 + $0x5a8] sm:$0xff]
  %v225 = vld [vmem:[%s1 + $0x5b0] sm:$0xff]
  %v226 = vld [vmem:[%s1 + $0x5b8] sm:$0xff]
  %v227 = vld [vmem:[%s1 + $0x5c0] sm:$0xff]
  %v228 = vld [vmem:[%s1 + $0x5c8] sm:$0xff]
  %v229 = vld [vmem:[%s1 + $0x5d0] sm:$0xff]
  %v230 = vld [vmem:[%s1 + $0x5d8] sm:$0xff]
  %v231 = vld [vmem:[%s1 + $0x5e0] sm:$0xff]
  %v232 = vld [vmem:[%s1 + $0x5e8] sm:$0xff]
  %v233 = vld [vmem:[%s1 + $0x5f0] sm:$0xff]
  %v234 = vld [vmem:[%s1 + $0x5f8] sm:$0xff]
  %v235 = vld [vmem:[%s1 + $0x600] sm:$0xff]
  %v236 = vld [vmem:[%s1 + $0x608] sm:$0xff]
  %v237 = vld [vmem:[%s1 + $0x610] sm:$0xff]
  %v238 = vld [vmem:[%s1 + $0x618] sm:$0xff]
  %v239 = vld [vmem:[%s1 + $0x620] sm:$0xff]
  %v240 = vld [vmem:[%s1 + $0x628] sm:$0xff]
  %v241 = vld [vmem:[%s1 + $0x630] sm:$0xff]
  %v242 = vld [vmem:[%s1 + $0x638] sm:$0xff]
  %v243 = vld [vmem:[%s1 + $0x640] sm:$0xff]
  %v244 = vld [vmem:[%s1 + $0x648] sm:$0xff]
  %v245 = vld [vmem:[%s1 + $0x650] sm:$0xff]
  %v246 = vld [vmem:[%s1 + $0x658] sm:$0xff]
  %v247 = vld [vmem:[%s1 + $0x660] sm:$0xff]
  %v248 = vld [vmem:[%s1 + $0x668] sm:$0xff]
  %v249 = vld [vmem:[%s1 + $0x670] sm:$0xff]
  %v250 = vld [vmem:[%s1 + $0x678] sm:$0xff]
  %v251 = vld [vmem:[%s1 + $0x680] sm:$0xff]
  %v252 = vld [vmem:[%s1 + $0x688] sm:$0xff]
  %v253 = vld [vmem:[%s1 + $0x690] sm:$0xff]
  %v254 = vld [vmem:[%s1 + $0x698] sm:$0xff]
  %v255 = vld [vmem:[%s1 + $0x6a0] sm:$0xff]
  %v256 = vld [vmem:[%s1 + $0x6a8] sm:$0xff]
  %v257 = vld [vmem:[%s1 + $0x6b0] sm:$0xff]
  %v258 = vld [vmem:[%s1 + $0x6b8] sm:$0xff]
  %v259 = vld [vmem:[%s1 + $0x6c0] sm:$0xff]
  %v260 = vld [vmem:[%s1 + $0x6c8] sm:$0xff]
  %v261 = vld [vmem:[%s1 + $0x6d0] sm:$0xff]
  %v262 = vld [vmem:[%s1 + $0x6d8] sm:$0xff]
  %v263 = vld [vmem:[%s1 + $0x6e0] sm:$0xff]
  %v264 = vld [vmem:[%s1 + $0x6e8] sm:$0xff]
  %v265 = vld [vmem:[%s1 + $0x6f0] sm:$0xff]
  %v266 = vld [vmem:[%s1 + $0x6f8] sm:$0xff]
  %v267 = vld [vmem:[%s2] sm:$0xf]
  %v269 = vlaneseq
  %v270 = vshrl.u32 %v269, 7
  %v271 = vsub.s32 0, %v270
  %v272 = vrot.slane %v267, %v271
  %v273 = vlaneseq
  %v274 = vshrl.u32 %v273, 7
  %v275 = vsub.s32 1, %v274
  %v276 = vrot.slane %v267, %v275
  %v277 = vlaneseq
  %v278 = vshrl.u32 %v277, 7
  %v279 = vsub.s32 2, %v278
  %v280 = vrot.slane %v267, %v279
  %v281 = vlaneseq
  %v282 = vshrl.u32 %v281, 7
  %v283 = vsub.s32 3, %v282
  %v284 = vrot.slane %v267, %v283
  %v293 = vunpack.c.l.b16 %v39
  %v294 = vunpack.c.h.b16 %v39
  %v295 = vunpack.c.l.b16 %v40
  %v296 = vunpack.c.h.b16 %v40
  %v297 = vunpack.c.l.b16 %v41
  %v298 = vunpack.c.h.b16 %v41
  %v299 = vunpack.c.l.b16 %v42
  %v300 = vpack.c.b16 %v293, %v293
  %v301 = vpack.c.b16 %v294, %v294
  %v302 = vpack.c.b16 %v295, %v295
  %v303 = vpack.c.b16 %v296, %v296
  %v304 = vpack.c.b16 %v297, %v297
  %v305 = vpack.c.b16 %v298, %v298
  %v306 = vpack.c.b16 %v299, %v299
  %v538 = vunpack.c.l.b16 %v43
  %v539 = vunpack.c.h.b16 %v43
  %v540 = vunpack.c.l.b16 %v44
  %v541 = vunpack.c.h.b16 %v44
  %v542 = vunpack.c.l.b16 %v45
  %v543 = vunpack.c.h.b16 %v45
  %v544 = vunpack.c.l.b16 %v46
  %v545 = vunpack.c.h.b16 %v46
  %v546 = vunpack.c.l.b16 %v47
  %v547 = vunpack.c.h.b16 %v47
  %v548 = vunpack.c.l.b16 %v48
  %v549 = vunpack.c.h.b16 %v48
  %v550 = vunpack.c.l.b16 %v49
  %v551 = vunpack.c.h.b16 %v49
  %v552 = vunpack.c.l.b16 %v50
  %v553 = vunpack.c.h.b16 %v50
  %v554 = vunpack.c.l.b16 %v51
  %v555 = vunpack.c.h.b16 %v51
  %v556 = vunpack.c.l.b16 %v52
  %v557 = vunpack.c.h.b16 %v52
  %v558 = vunpack.c.l.b16 %v53
  %v559 = vunpack.c.h.b16 %v53
  %v560 = vunpack.c.l.b16 %v54
  %v561 = vunpack.c.h.b16 %v54
  %v562 = vunpack.c.l.b16 %v55
  %v563 = vunpack.c.h.b16 %v55
  %v564 = vunpack.c.l.b16 %v56
  %v565 = vunpack.c.h.b16 %v56
  %v566 = vunpack.c.l.b16 %v57
  %v567 = vunpack.c.h.b16 %v57
  %v568 = vunpack.c.l.b16 %v58
  %v569 = vunpack.c.h.b16 %v58
  %v570 = vunpack.c.l.b16 %v59
  %v571 = vunpack.c.h.b16 %v59
  %v572 = vunpack.c.l.b16 %v60
  %v573 = vunpack.c.h.b16 %v60
  %v574 = vunpack.c.l.b16 %v61
  %v575 = vunpack.c.h.b16 %v61
  %v576 = vunpack.c.l.b16 %v62
  %v577 = vunpack.c.h.b16 %v62
  %v578 = vunpack.c.l.b16 %v63
  %v579 = vunpack.c.h.b16 %v63
  %v580 = vunpack.c.l.b16 %v64
  %v581 = vunpack.c.h.b16 %v64
  %v582 = vunpack.c.l.b16 %v65
  %v583 = vunpack.c.h.b16 %v65
  %v584 = vunpack.c.l.b16 %v66
  %v585 = vunpack.c.h.b16 %v66
  %v586 = vunpack.c.l.b16 %v67
  %v587 = vunpack.c.h.b16 %v67
  %v588 = vunpack.c.l.b16 %v68
  %v589 = vunpack.c.h.b16 %v68
  %v590 = vunpack.c.l.b16 %v69
  %v591 = vunpack.c.h.b16 %v69
  %v592 = vunpack.c.l.b16 %v70
  %v593 = vunpack.c.h.b16 %v70
  %v594 = vunpack.c.l.b16 %v71
  %v595 = vunpack.c.h.b16 %v71
  %v596 = vunpack.c.l.b16 %v72
  %v597 = vunpack.c.h.b16 %v72
  %v598 = vunpack.c.l.b16 %v73
  %v599 = vunpack.c.h.b16 %v73
  %v600 = vunpack.c.l.b16 %v74
  %v601 = vunpack.c.h.b16 %v74
  %v602 = vunpack.c.l.b16 %v75
  %v603 = vunpack.c.h.b16 %v75
  %v604 = vunpack.c.l.b16 %v76
  %v605 = vunpack.c.h.b16 %v76
  %v606 = vunpack.c.l.b16 %v77
  %v607 = vunpack.c.h.b16 %v77
  %v608 = vunpack.c.l.b16 %v78
  %v609 = vunpack.c.h.b16 %v78
  %v610 = vunpack.c.l.b16 %v79
  %v611 = vunpack.c.h.b16 %v79
  %v612 = vunpack.c.l.b16 %v80
  %v613 = vunpack.c.h.b16 %v80
  %v614 = vunpack.c.l.b16 %v81
  %v615 = vunpack.c.h.b16 %v81
  %v616 = vunpack.c.l.b16 %v82
  %v617 = vunpack.c.h.b16 %v82
  %v618 = vunpack.c.l.b16 %v83
  %v619 = vunpack.c.h.b16 %v83
  %v620 = vunpack.c.l.b16 %v84
  %v621 = vunpack.c.h.b16 %v84
  %v622 = vunpack.c.l.b16 %v85
  %v623 = vunpack.c.h.b16 %v85
  %v624 = vunpack.c.l.b16 %v86
  %v625 = vunpack.c.h.b16 %v86
  %v626 = vunpack.c.l.b16 %v87
  %v627 = vunpack.c.h.b16 %v87
  %v628 = vunpack.c.l.b16 %v88
  %v629 = vunpack.c.h.b16 %v88
  %v630 = vunpack.c.l.b16 %v89
  %v631 = vunpack.c.h.b16 %v89
  %v632 = vunpack.c.l.b16 %v90
  %v633 = vunpack.c.h.b16 %v90
  %v634 = vunpack.c.l.b16 %v91
  %v635 = vunpack.c.h.b16 %v91
  %v636 = vunpack.c.l.b16 %v92
  %v637 = vunpack.c.h.b16 %v92
  %v638 = vunpack.c.l.b16 %v93
  %v639 = vunpack.c.h.b16 %v93
  %v640 = vunpack.c.l.b16 %v94
  %v641 = vunpack.c.h.b16 %v94
  %v642 = vunpack.c.l.b16 %v95
  %v643 = vunpack.c.h.b16 %v95
  %v644 = vunpack.c.l.b16 %v96
  %v645 = vunpack.c.h.b16 %v96
  %v646 = vunpack.c.l.b16 %v97
  %v647 = vunpack.c.h.b16 %v97
  %v648 = vunpack.c.l.b16 %v98
  %v649 = vunpack.c.h.b16 %v98
  %v650 = vunpack.c.l.b16 %v99
  %v651 = vunpack.c.h.b16 %v99
  %v652 = vunpack.c.l.b16 %v100
  %v653 = vunpack.c.h.b16 %v100
  %v654 = vunpack.c.l.b16 %v101
  %v655 = vunpack.c.h.b16 %v101
  %v656 = vunpack.c.l.b16 %v102
  %v657 = vunpack.c.h.b16 %v102
  %v658 = vunpack.c.l.b16 %v103
  %v659 = vunpack.c.h.b16 %v103
  %v660 = vunpack.c.l.b16 %v104
  %v661 = vunpack.c.h.b16 %v104
  %v662 = vunpack.c.l.b16 %v105
  %v663 = vunpack.c.h.b16 %v105
  %v664 = vunpack.c.l.b16 %v106
  %v665 = vunpack.c.h.b16 %v106
  %v666 = vunpack.c.l.b16 %v107
  %v667 = vunpack.c.h.b16 %v107
  %v668 = vunpack.c.l.b16 %v108
  %v669 = vunpack.c.h.b16 %v108
  %v670 = vunpack.c.l.b16 %v109
  %v671 = vunpack.c.h.b16 %v109
  %v672 = vunpack.c.l.b16 %v110
  %v673 = vunpack.c.h.b16 %v110
  %v674 = vunpack.c.l.b16 %v111
  %v675 = vunpack.c.h.b16 %v111
  %v676 = vunpack.c.l.b16 %v112
  %v677 = vunpack.c.h.b16 %v112
  %v678 = vunpack.c.l.b16 %v113
  %v679 = vunpack.c.h.b16 %v113
  %v680 = vunpack.c.l.b16 %v114
  %v681 = vunpack.c.h.b16 %v114
  %v682 = vunpack.c.l.b16 %v115
  %v683 = vunpack.c.h.b16 %v115
  %v684 = vunpack.c.l.b16 %v116
  %v685 = vunpack.c.h.b16 %v116
  %v686 = vunpack.c.l.b16 %v117
  %v687 = vunpack.c.h.b16 %v117
  %v688 = vunpack.c.l.b16 %v118
  %v689 = vunpack.c.h.b16 %v118
  %v690 = vunpack.c.l.b16 %v119
  %v691 = vunpack.c.h.b16 %v119
  %v692 = vunpack.c.l.b16 %v120
  %v693 = vunpack.c.h.b16 %v120
  %v694 = vunpack.c.l.b16 %v121
  %v695 = vunpack.c.h.b16 %v121
  %v696 = vunpack.c.l.b16 %v122
  %v697 = vunpack.c.h.b16 %v122
  %v698 = vunpack.c.l.b16 %v123
  %v699 = vunpack.c.h.b16 %v123
  %v700 = vunpack.c.l.b16 %v124
  %v701 = vunpack.c.h.b16 %v124
  %v702 = vunpack.c.l.b16 %v125
  %v703 = vunpack.c.h.b16 %v125
  %v704 = vunpack.c.l.b16 %v126
  %v705 = vunpack.c.h.b16 %v126
  %v706 = vunpack.c.l.b16 %v127
  %v707 = vunpack.c.h.b16 %v127
  %v708 = vunpack.c.l.b16 %v128
  %v709 = vunpack.c.h.b16 %v128
  %v710 = vunpack.c.l.b16 %v129
  %v711 = vunpack.c.h.b16 %v129
  %v712 = vunpack.c.l.b16 %v130
  %v713 = vunpack.c.h.b16 %v130
  %v714 = vunpack.c.l.b16 %v131
  %v715 = vunpack.c.h.b16 %v131
  %v716 = vunpack.c.l.b16 %v132
  %v717 = vunpack.c.h.b16 %v132
  %v718 = vunpack.c.l.b16 %v133
  %v719 = vunpack.c.h.b16 %v133
  %v720 = vunpack.c.l.b16 %v134
  %v721 = vunpack.c.h.b16 %v134
  %v722 = vunpack.c.l.b16 %v135
  %v723 = vunpack.c.h.b16 %v135
  %v724 = vunpack.c.l.b16 %v136
  %v725 = vunpack.c.h.b16 %v136
  %v726 = vunpack.c.l.b16 %v137
  %v727 = vunpack.c.h.b16 %v137
  %v728 = vunpack.c.l.b16 %v138
  %v729 = vunpack.c.h.b16 %v138
  %v730 = vunpack.c.l.b16 %v139
  %v731 = vunpack.c.h.b16 %v139
  %v732 = vunpack.c.l.b16 %v140
  %v733 = vunpack.c.h.b16 %v140
  %v734 = vunpack.c.l.b16 %v141
  %v735 = vunpack.c.h.b16 %v141
  %v736 = vunpack.c.l.b16 %v142
  %v737 = vunpack.c.h.b16 %v142
  %v738 = vunpack.c.l.b16 %v143
  %v739 = vunpack.c.h.b16 %v143
  %v740 = vunpack.c.l.b16 %v144
  %v741 = vunpack.c.h.b16 %v144
  %v742 = vunpack.c.l.b16 %v145
  %v743 = vunpack.c.h.b16 %v145
  %v744 = vunpack.c.l.b16 %v146
  %v745 = vunpack.c.h.b16 %v146
  %v746 = vunpack.c.l.b16 %v147
  %v747 = vunpack.c.h.b16 %v147
  %v748 = vunpack.c.l.b16 %v148
  %v749 = vunpack.c.h.b16 %v148
  %v750 = vunpack.c.l.b16 %v149
  %v751 = vunpack.c.h.b16 %v149
  %v752 = vunpack.c.l.b16 %v150
  %v753 = vunpack.c.h.b16 %v150
  %v754 = vunpack.c.l.b16 %v151
  %v755 = vunpack.c.h.b16 %v151
  %v756 = vunpack.c.l.b16 %v152
  %v757 = vunpack.c.h.b16 %v152
  %v758 = vunpack.c.l.b16 %v153
  %v759 = vunpack.c.h.b16 %v153
  %v760 = vunpack.c.l.b16 %v154
  %v761 = vunpack.c.h.b16 %v154
  %v762 = vunpack.c.l.b16 %v155
  %v763 = vunpack.c.h.b16 %v155
  %v764 = vunpack.c.l.b16 %v156
  %v765 = vunpack.c.h.b16 %v156
  %v766 = vunpack.c.l.b16 %v157
  %v767 = vunpack.c.h.b16 %v157
  %v768 = vunpack.c.l.b16 %v158
  %v769 = vunpack.c.h.b16 %v158
  %v770 = vunpack.c.l.b16 %v159
  %v771 = vunpack.c.h.b16 %v159
  %v772 = vunpack.c.l.b16 %v160
  %v773 = vunpack.c.h.b16 %v160
  %v774 = vunpack.c.l.b16 %v161
  %v775 = vunpack.c.h.b16 %v161
  %v776 = vunpack.c.l.b16 %v162
  %v777 = vunpack.c.h.b16 %v162
  %v778 = vunpack.c.l.b16 %v163
  %v779 = vunpack.c.h.b16 %v163
  %v780 = vunpack.c.l.b16 %v164
  %v781 = vunpack.c.h.b16 %v164
  %v782 = vunpack.c.l.b16 %v165
  %v783 = vunpack.c.h.b16 %v165
  %v784 = vunpack.c.l.b16 %v166
  %v785 = vunpack.c.h.b16 %v166
  %v786 = vunpack.c.l.b16 %v167
  %v787 = vunpack.c.h.b16 %v167
  %v788 = vunpack.c.l.b16 %v168
  %v789 = vunpack.c.h.b16 %v168
  %v790 = vunpack.c.l.b16 %v169
  %v791 = vunpack.c.h.b16 %v169
  %v792 = vunpack.c.l.b16 %v170
  %v793 = vunpack.c.h.b16 %v170
  %v794 = vunpack.c.l.b16 %v171
  %v795 = vunpack.c.h.b16 %v171
  %v796 = vunpack.c.l.b16 %v172
  %v797 = vunpack.c.h.b16 %v172
  %v798 = vunpack.c.l.b16 %v173
  %v799 = vunpack.c.h.b16 %v173
  %v800 = vunpack.c.l.b16 %v174
  %v801 = vunpack.c.h.b16 %v174
  %v802 = vunpack.c.l.b16 %v175
  %v803 = vunpack.c.h.b16 %v175
  %v804 = vunpack.c.l.b16 %v176
  %v805 = vunpack.c.h.b16 %v176
  %v806 = vunpack.c.l.b16 %v177
  %v807 = vunpack.c.h.b16 %v177
  %v808 = vunpack.c.l.b16 %v178
  %v809 = vunpack.c.h.b16 %v178
  %v810 = vunpack.c.l.b16 %v179
  %v811 = vunpack.c.h.b16 %v179
  %v812 = vunpack.c.l.b16 %v180
  %v813 = vunpack.c.h.b16 %v180
  %v814 = vunpack.c.l.b16 %v181
  %v815 = vunpack.c.h.b16 %v181
  %v816 = vunpack.c.l.b16 %v182
  %v817 = vunpack.c.h.b16 %v182
  %v818 = vunpack.c.l.b16 %v183
  %v819 = vunpack.c.h.b16 %v183
  %v820 = vunpack.c.l.b16 %v184
  %v821 = vunpack.c.h.b16 %v184
  %v822 = vunpack.c.l.b16 %v185
  %v823 = vunpack.c.h.b16 %v185
  %v824 = vunpack.c.l.b16 %v186
  %v825 = vunpack.c.h.b16 %v186
  %v826 = vunpack.c.l.b16 %v187
  %v827 = vunpack.c.h.b16 %v187
  %v828 = vunpack.c.l.b16 %v188
  %v829 = vunpack.c.h.b16 %v188
  %v830 = vunpack.c.l.b16 %v189
  %v831 = vunpack.c.h.b16 %v189
  %v832 = vunpack.c.l.b16 %v190
  %v833 = vunpack.c.h.b16 %v190
  %v834 = vunpack.c.l.b16 %v191
  %v835 = vunpack.c.h.b16 %v191
  %v836 = vunpack.c.l.b16 %v192
  %v837 = vunpack.c.h.b16 %v192
  %v838 = vunpack.c.l.b16 %v193
  %v839 = vunpack.c.h.b16 %v193
  %v840 = vunpack.c.l.b16 %v194
  %v841 = vunpack.c.h.b16 %v194
  %v842 = vunpack.c.l.b16 %v195
  %v843 = vunpack.c.h.b16 %v195
  %v844 = vunpack.c.l.b16 %v196
  %v845 = vunpack.c.h.b16 %v196
  %v846 = vunpack.c.l.b16 %v197
  %v847 = vunpack.c.h.b16 %v197
  %v848 = vunpack.c.l.b16 %v198
  %v849 = vunpack.c.h.b16 %v198
  %v850 = vunpack.c.l.b16 %v199
  %v851 = vunpack.c.h.b16 %v199
  %v852 = vunpack.c.l.b16 %v200
  %v853 = vunpack.c.h.b16 %v200
  %v854 = vunpack.c.l.b16 %v201
  %v855 = vunpack.c.h.b16 %v201
  %v856 = vunpack.c.l.b16 %v202
  %v857 = vunpack.c.h.b16 %v202
  %v858 = vunpack.c.l.b16 %v203
  %v859 = vunpack.c.h.b16 %v203
  %v860 = vunpack.c.l.b16 %v204
  %v861 = vunpack.c.h.b16 %v204
  %v862 = vunpack.c.l.b16 %v205
  %v863 = vunpack.c.h.b16 %v205
  %v864 = vunpack.c.l.b16 %v206
  %v865 = vunpack.c.h.b16 %v206
  %v866 = vunpack.c.l.b16 %v207
  %v867 = vunpack.c.h.b16 %v207
  %v868 = vunpack.c.l.b16 %v208
  %v869 = vunpack.c.h.b16 %v208
  %v870 = vunpack.c.l.b16 %v209
  %v871 = vunpack.c.h.b16 %v209
  %v872 = vunpack.c.l.b16 %v210
  %v873 = vunpack.c.h.b16 %v210
  %v874 = vunpack.c.l.b16 %v211
  %v875 = vunpack.c.h.b16 %v211
  %v876 = vunpack.c.l.b16 %v212
  %v877 = vunpack.c.h.b16 %v212
  %v878 = vunpack.c.l.b16 %v213
  %v879 = vunpack.c.h.b16 %v213
  %v880 = vunpack.c.l.b16 %v214
  %v881 = vunpack.c.h.b16 %v214
  %v882 = vunpack.c.l.b16 %v215
  %v883 = vunpack.c.h.b16 %v215
  %v884 = vunpack.c.l.b16 %v216
  %v885 = vunpack.c.h.b16 %v216
  %v886 = vunpack.c.l.b16 %v217
  %v887 = vunpack.c.h.b16 %v217
  %v888 = vunpack.c.l.b16 %v218
  %v889 = vunpack.c.h.b16 %v218
  %v890 = vunpack.c.l.b16 %v219
  %v891 = vunpack.c.h.b16 %v219
  %v892 = vunpack.c.l.b16 %v220
  %v893 = vunpack.c.h.b16 %v220
  %v894 = vunpack.c.l.b16 %v221
  %v895 = vunpack.c.h.b16 %v221
  %v896 = vunpack.c.l.b16 %v222
  %v897 = vunpack.c.h.b16 %v222
  %v898 = vunpack.c.l.b16 %v223
  %v899 = vunpack.c.h.b16 %v223
  %v900 = vunpack.c.l.b16 %v224
  %v901 = vunpack.c.h.b16 %v224
  %v902 = vunpack.c.l.b16 %v225
  %v903 = vunpack.c.h.b16 %v225
  %v904 = vunpack.c.l.b16 %v226
  %v905 = vunpack.c.h.b16 %v226
  %v906 = vunpack.c.l.b16 %v227
  %v907 = vunpack.c.h.b16 %v227
  %v908 = vunpack.c.l.b16 %v228
  %v909 = vunpack.c.h.b16 %v228
  %v910 = vunpack.c.l.b16 %v229
  %v911 = vunpack.c.h.b16 %v229
  %v912 = vunpack.c.l.b16 %v230
  %v913 = vunpack.c.h.b16 %v230
  %v914 = vunpack.c.l.b16 %v231
  %v915 = vunpack.c.h.b16 %v231
  %v916 = vunpack.c.l.b16 %v232
  %v917 = vunpack.c.h.b16 %v232
  %v918 = vunpack.c.l.b16 %v233
  %v919 = vunpack.c.h.b16 %v233
  %v920 = vunpack.c.l.b16 %v234
  %v921 = vunpack.c.h.b16 %v234
  %v922 = vunpack.c.l.b16 %v235
  %v923 = vunpack.c.h.b16 %v235
  %v924 = vunpack.c.l.b16 %v236
  %v925 = vunpack.c.h.b16 %v236
  %v926 = vunpack.c.l.b16 %v237
  %v927 = vunpack.c.h.b16 %v237
  %v928 = vunpack.c.l.b16 %v238
  %v929 = vunpack.c.h.b16 %v238
  %v930 = vunpack.c.l.b16 %v239
  %v931 = vunpack.c.h.b16 %v239
  %v932 = vunpack.c.l.b16 %v240
  %v933 = vunpack.c.h.b16 %v240
  %v934 = vunpack.c.l.b16 %v241
  %v935 = vunpack.c.h.b16 %v241
  %v936 = vunpack.c.l.b16 %v242
  %v937 = vunpack.c.h.b16 %v242
  %v938 = vunpack.c.l.b16 %v243
  %v939 = vunpack.c.h.b16 %v243
  %v940 = vunpack.c.l.b16 %v244
  %v941 = vunpack.c.h.b16 %v244
  %v942 = vunpack.c.l.b16 %v245
  %v943 = vunpack.c.h.b16 %v245
  %v944 = vunpack.c.l.b16 %v246
  %v945 = vunpack.c.h.b16 %v246
  %v946 = vunpack.c.l.b16 %v247
  %v947 = vunpack.c.h.b16 %v247
  %v948 = vunpack.c.l.b16 %v248
  %v949 = vunpack.c.h.b16 %v248
  %v950 = vunpack.c.l.b16 %v249
  %v951 = vunpack.c.h.b16 %v249
  %v952 = vunpack.c.l.b16 %v250
  %v953 = vunpack.c.h.b16 %v250
  %v954 = vunpack.c.l.b16 %v251
  %v955 = vunpack.c.h.b16 %v251
  %v956 = vunpack.c.l.b16 %v252
  %v957 = vunpack.c.h.b16 %v252
  %v958 = vunpack.c.l.b16 %v253
  %v959 = vunpack.c.h.b16 %v253
  %v960 = vunpack.c.l.b16 %v254
  %v961 = vunpack.c.h.b16 %v254
  %v962 = vunpack.c.l.b16 %v255
  %v963 = vunpack.c.h.b16 %v255
  %v964 = vunpack.c.l.b16 %v256
  %v965 = vunpack.c.h.b16 %v256
  %v966 = vunpack.c.l.b16 %v257
  %v967 = vunpack.c.h.b16 %v257
  %v968 = vunpack.c.l.b16 %v258
  %v969 = vunpack.c.h.b16 %v258
  %v970 = vunpack.c.l.b16 %v259
  %v971 = vunpack.c.h.b16 %v259
  %v972 = vunpack.c.l.b16 %v260
  %v973 = vunpack.c.h.b16 %v260
  %v974 = vunpack.c.l.b16 %v261
  %v975 = vunpack.c.h.b16 %v261
  %v976 = vunpack.c.l.b16 %v262
  %v977 = vunpack.c.h.b16 %v262
  %v978 = vunpack.c.l.b16 %v263
  %v979 = vunpack.c.h.b16 %v263
  %v980 = vunpack.c.l.b16 %v264
  %v981 = vunpack.c.h.b16 %v264
  %v982 = vunpack.c.l.b16 %v265
  %v983 = vunpack.c.h.b16 %v265
  %v984 = vunpack.c.l.b16 %v266
  %v985 = vunpack.c.h.b16 %v266
  %v986 = vpack.c.b16 %v542, %v538
  %v987 = vpack.c.b16 %v543, %v539
  %v988 = vpack.c.b16 %v544, %v540
  %v989 = vpack.c.b16 %v545, %v541
  %v990 = vpack.c.b16 %v550, %v546
  %v991 = vpack.c.b16 %v551, %v547
  %v992 = vpack.c.b16 %v552, %v548
  %v993 = vpack.c.b16 %v553, %v549
  %v994 = vpack.c.b16 %v558, %v554
  %v995 = vpack.c.b16 %v559, %v555
  %v996 = vpack.c.b16 %v560, %v556
  %v997 = vpack.c.b16 %v561, %v557
  %v998 = vpack.c.b16 %v566, %v562
  %v999 = vpack.c.b16 %v567, %v563
  %v1000 = vpack.c.b16 %v568, %v564
  %v1001 = vpack.c.b16 %v569, %v565
  %v1002 = vpack.c.b16 %v574, %v570
  %v1003 = vpack.c.b16 %v575, %v571
  %v1004 = vpack.c.b16 %v576, %v572
  %v1005 = vpack.c.b16 %v577, %v573
  %v1006 = vpack.c.b16 %v582, %v578
  %v1007 = vpack.c.b16 %v583, %v579
  %v1008 = vpack.c.b16 %v584, %v580
  %v1009 = vpack.c.b16 %v585, %v581
  %v1010 = vpack.c.b16 %v590, %v586
  %v1011 = vpack.c.b16 %v591, %v587
  %v1012 = vpack.c.b16 %v592, %v588
  %v1013 = vpack.c.b16 %v593, %v589
  %v1014 = vpack.c.b16 %v598, %v594
  %v1015 = vpack.c.b16 %v599, %v595
  %v1016 = vpack.c.b16 %v600, %v596
  %v1017 = vpack.c.b16 %v601, %v597
  %v1018 = vpack.c.b16 %v606, %v602
  %v1019 = vpack.c.b16 %v607, %v603
  %v1020 = vpack.c.b16 %v608, %v604
  %v1021 = vpack.c.b16 %v609, %v605
  %v1022 = vpack.c.b16 %v614, %v610
  %v1023 = vpack.c.b16 %v615, %v611
  %v1024 = vpack.c.b16 %v616, %v612
  %v1025 = vpack.c.b16 %v617, %v613
  %v1026 = vpack.c.b16 %v622, %v618
  %v1027 = vpack.c.b16 %v623, %v619
  %v1028 = vpack.c.b16 %v624, %v620
  %v1029 = vpack.c.b16 %v625, %v621
  %v1030 = vpack.c.b16 %v630, %v626
  %v1031 = vpack.c.b16 %v631, %v627
  %v1032 = vpack.c.b16 %v632, %v628
  %v1033 = vpack.c.b16 %v633, %v629
  %v1034 = vpack.c.b16 %v638, %v634
  %v1035 = vpack.c.b16 %v639, %v635
  %v1036 = vpack.c.b16 %v640, %v636
  %v1037 = vpack.c.b16 %v641, %v637
  %v1038 = vpack.c.b16 %v646, %v642
  %v1039 = vpack.c.b16 %v647, %v643
  %v1040 = vpack.c.b16 %v648, %v644
  %v1041 = vpack.c.b16 %v649, %v645
  %v1042 = vpack.c.b16 %v654, %v650
  %v1043 = vpack.c.b16 %v655, %v651
  %v1044 = vpack.c.b16 %v656, %v652
  %v1045 = vpack.c.b16 %v657, %v653
  %v1046 = vpack.c.b16 %v662, %v658
  %v1047 = vpack.c.b16 %v663, %v659
  %v1048 = vpack.c.b16 %v664, %v660
  %v1049 = vpack.c.b16 %v665, %v661
  %v1050 = vpack.c.b16 %v670, %v666
  %v1051 = vpack.c.b16 %v671, %v667
  %v1052 = vpack.c.b16 %v672, %v668
  %v1053 = vpack.c.b16 %v673, %v669
  %v1054 = vpack.c.b16 %v678, %v674
  %v1055 = vpack.c.b16 %v679, %v675
  %v1056 = vpack.c.b16 %v680, %v676
  %v1057 = vpack.c.b16 %v681, %v677
  %v1058 = vpack.c.b16 %v686, %v682
  %v1059 = vpack.c.b16 %v687, %v683
  %v1060 = vpack.c.b16 %v688, %v684
  %v1061 = vpack.c.b16 %v689, %v685
  %v1062 = vpack.c.b16 %v694, %v690
  %v1063 = vpack.c.b16 %v695, %v691
  %v1064 = vpack.c.b16 %v696, %v692
  %v1065 = vpack.c.b16 %v697, %v693
  %v1066 = vpack.c.b16 %v702, %v698
  %v1067 = vpack.c.b16 %v703, %v699
  %v1068 = vpack.c.b16 %v704, %v700
  %v1069 = vpack.c.b16 %v705, %v701
  %v1070 = vpack.c.b16 %v710, %v706
  %v1071 = vpack.c.b16 %v711, %v707
  %v1072 = vpack.c.b16 %v712, %v708
  %v1073 = vpack.c.b16 %v713, %v709
  %v1074 = vpack.c.b16 %v718, %v714
  %v1075 = vpack.c.b16 %v719, %v715
  %v1076 = vpack.c.b16 %v720, %v716
  %v1077 = vpack.c.b16 %v721, %v717
  %v1078 = vpack.c.b16 %v726, %v722
  %v1079 = vpack.c.b16 %v727, %v723
  %v1080 = vpack.c.b16 %v728, %v724
  %v1081 = vpack.c.b16 %v729, %v725
  %v1082 = vpack.c.b16 %v734, %v730
  %v1083 = vpack.c.b16 %v735, %v731
  %v1084 = vpack.c.b16 %v736, %v732
  %v1085 = vpack.c.b16 %v737, %v733
  %v1086 = vpack.c.b16 %v742, %v738
  %v1087 = vpack.c.b16 %v743, %v739
  %v1088 = vpack.c.b16 %v744, %v740
  %v1089 = vpack.c.b16 %v745, %v741
  %v1090 = vpack.c.b16 %v750, %v746
  %v1091 = vpack.c.b16 %v751, %v747
  %v1092 = vpack.c.b16 %v752, %v748
  %v1093 = vpack.c.b16 %v753, %v749
  %v1094 = vpack.c.b16 %v758, %v754
  %v1095 = vpack.c.b16 %v759, %v755
  %v1096 = vpack.c.b16 %v760, %v756
  %v1097 = vpack.c.b16 %v761, %v757
  %v1098 = vpack.c.b16 %v766, %v762
  %v1099 = vpack.c.b16 %v767, %v763
  %v1100 = vpack.c.b16 %v768, %v764
  %v1101 = vpack.c.b16 %v769, %v765
  %v1102 = vpack.c.b16 %v774, %v770
  %v1103 = vpack.c.b16 %v775, %v771
  %v1104 = vpack.c.b16 %v776, %v772
  %v1105 = vpack.c.b16 %v777, %v773
  %v1106 = vpack.c.b16 %v782, %v778
  %v1107 = vpack.c.b16 %v783, %v779
  %v1108 = vpack.c.b16 %v784, %v780
  %v1109 = vpack.c.b16 %v785, %v781
  %v1110 = vpack.c.b16 %v790, %v786
  %v1111 = vpack.c.b16 %v791, %v787
  %v1112 = vpack.c.b16 %v792, %v788
  %v1113 = vpack.c.b16 %v793, %v789
  %v1114 = vpack.c.b16 %v798, %v794
  %v1115 = vpack.c.b16 %v799, %v795
  %v1116 = vpack.c.b16 %v800, %v796
  %v1117 = vpack.c.b16 %v801, %v797
  %v1118 = vpack.c.b16 %v806, %v802
  %v1119 = vpack.c.b16 %v807, %v803
  %v1120 = vpack.c.b16 %v808, %v804
  %v1121 = vpack.c.b16 %v809, %v805
  %v1122 = vpack.c.b16 %v814, %v810
  %v1123 = vpack.c.b16 %v815, %v811
  %v1124 = vpack.c.b16 %v816, %v812
  %v1125 = vpack.c.b16 %v817, %v813
  %v1126 = vpack.c.b16 %v822, %v818
  %v1127 = vpack.c.b16 %v823, %v819
  %v1128 = vpack.c.b16 %v824, %v820
  %v1129 = vpack.c.b16 %v825, %v821
  %v1130 = vpack.c.b16 %v830, %v826
  %v1131 = vpack.c.b16 %v831, %v827
  %v1132 = vpack.c.b16 %v832, %v828
  %v1133 = vpack.c.b16 %v833, %v829
  %v1134 = vpack.c.b16 %v838, %v834
  %v1135 = vpack.c.b16 %v839, %v835
  %v1136 = vpack.c.b16 %v840, %v836
  %v1137 = vpack.c.b16 %v841, %v837
  %v1138 = vpack.c.b16 %v846, %v842
  %v1139 = vpack.c.b16 %v847, %v843
  %v1140 = vpack.c.b16 %v848, %v844
  %v1141 = vpack.c.b16 %v849, %v845
  %v1142 = vpack.c.b16 %v854, %v850
  %v1143 = vpack.c.b16 %v855, %v851
  %v1144 = vpack.c.b16 %v856, %v852
  %v1145 = vpack.c.b16 %v857, %v853
  %v1146 = vpack.c.b16 %v862, %v858
  %v1147 = vpack.c.b16 %v863, %v859
  %v1148 = vpack.c.b16 %v864, %v860
  %v1149 = vpack.c.b16 %v865, %v861
  %v1150 = vpack.c.b16 %v870, %v866
  %v1151 = vpack.c.b16 %v871, %v867
  %v1152 = vpack.c.b16 %v872, %v868
  %v1153 = vpack.c.b16 %v873, %v869
  %v1154 = vpack.c.b16 %v878, %v874
  %v1155 = vpack.c.b16 %v879, %v875
  %v1156 = vpack.c.b16 %v880, %v876
  %v1157 = vpack.c.b16 %v881, %v877
  %v1158 = vpack.c.b16 %v886, %v882
  %v1159 = vpack.c.b16 %v887, %v883
  %v1160 = vpack.c.b16 %v888, %v884
  %v1161 = vpack.c.b16 %v889, %v885
  %v1162 = vpack.c.b16 %v894, %v890
  %v1163 = vpack.c.b16 %v895, %v891
  %v1164 = vpack.c.b16 %v896, %v892
  %v1165 = vpack.c.b16 %v897, %v893
  %v1166 = vpack.c.b16 %v902, %v898
  %v1167 = vpack.c.b16 %v903, %v899
  %v1168 = vpack.c.b16 %v904, %v900
  %v1169 = vpack.c.b16 %v905, %v901
  %v1170 = vpack.c.b16 %v910, %v906
  %v1171 = vpack.c.b16 %v911, %v907
  %v1172 = vpack.c.b16 %v912, %v908
  %v1173 = vpack.c.b16 %v913, %v909
  %v1174 = vpack.c.b16 %v918, %v914
  %v1175 = vpack.c.b16 %v919, %v915
  %v1176 = vpack.c.b16 %v920, %v916
  %v1177 = vpack.c.b16 %v921, %v917
  %v1178 = vpack.c.b16 %v926, %v922
  %v1179 = vpack.c.b16 %v927, %v923
  %v1180 = vpack.c.b16 %v928, %v924
  %v1181 = vpack.c.b16 %v929, %v925
  %v1182 = vpack.c.b16 %v934, %v930
  %v1183 = vpack.c.b16 %v935, %v931
  %v1184 = vpack.c.b16 %v936, %v932
  %v1185 = vpack.c.b16 %v937, %v933
  %v1186 = vpack.c.b16 %v942, %v938
  %v1187 = vpack.c.b16 %v943, %v939
  %v1188 = vpack.c.b16 %v944, %v940
  %v1189 = vpack.c.b16 %v945, %v941
  %v1190 = vpack.c.b16 %v950, %v946
  %v1191 = vpack.c.b16 %v951, %v947
  %v1192 = vpack.c.b16 %v952, %v948
  %v1193 = vpack.c.b16 %v953, %v949
  %v1194 = vpack.c.b16 %v958, %v954
  %v1195 = vpack.c.b16 %v959, %v955
  %v1196 = vpack.c.b16 %v960, %v956
  %v1197 = vpack.c.b16 %v961, %v957
  %v1198 = vpack.c.b16 %v966, %v962
  %v1199 = vpack.c.b16 %v967, %v963
  %v1200 = vpack.c.b16 %v968, %v964
  %v1201 = vpack.c.b16 %v969, %v965
  %v1202 = vpack.c.b16 %v974, %v970
  %v1203 = vpack.c.b16 %v975, %v971
  %v1204 = vpack.c.b16 %v976, %v972
  %v1205 = vpack.c.b16 %v977, %v973
  %v1206 = vpack.c.b16 %v982, %v978
  %v1207 = vpack.c.b16 %v983, %v979
  %v1208 = vpack.c.b16 %v984, %v980
  %v1209 = vpack.c.b16 %v985, %v981
  %1434 = vmatprep.subr.bf16.mxu0 %v987
  %1435 = vmatpush1.bf16.msra.mxu0 %v986
  %1436 = vmatprep.subr.bf16.mxu0 %v991
  %1437 = vmatpush1.bf16.msra.mxu0 %v990
  %1438 = vmatprep.subr.bf16.mxu0 %v995
  %1439 = vmatpush1.bf16.msra.mxu0 %v994
  %1440 = vmatprep.subr.bf16.mxu0 %v999
  %1441 = vmatpush1.bf16.msra.mxu0 %v998
  %1442 = vmatprep.subr.bf16.mxu0 %v1003
  %1443 = vmatpush1.bf16.msra.mxu0 %v1002
  %1444 = vmatprep.subr.bf16.mxu0 %v1007
  %1445 = vmatpush1.bf16.msra.mxu0 %v1006
  %1446 = vmatprep.subr.bf16.mxu0 %v1011
  %1447 = vmatpush1.bf16.msra.mxu0 %v1010
  %1448 = vmatprep.subr.bf16.mxu0 %v1015
  %1449 = vmatpush1.bf16.msra.mxu0 %v1014
  %1450 = vmatprep.subr.bf16.mxu0 %v1019
  %1451 = vmatpush1.bf16.msra.mxu0 %v1018
  %1452 = vmatprep.subr.bf16.mxu0 %v1023
  %1453 = vmatpush1.bf16.msra.mxu0 %v1022
  %1454 = vmatprep.subr.bf16.mxu0 %v1027
  %1455 = vmatpush1.bf16.msra.mxu0 %v1026
  %1456 = vmatprep.subr.bf16.mxu0 %v1031
  %1457 = vmatpush1.bf16.msra.mxu0 %v1030
  %1458 = vmatprep.subr.bf16.mxu0 %v1035
  %1459 = vmatpush1.bf16.msra.mxu0 %v1034
  %1460 = vmatprep.subr.bf16.mxu0 %v1039
  %1461 = vmatpush1.bf16.msra.mxu0 %v1038
  %1462 = vmatprep.subr.bf16.mxu0 %v1043
  %1463 = vmatpush1.bf16.msra.mxu0 %v1042
  %1464 = vmatprep.subr.bf16.mxu0 %v1047
  %1465 = vmatpush1.bf16.msra.mxu0 %v1046
  %1466 = vmatprep.mubr.bf16.mxu0 %v301
  %1467 = vmatmul.mubr.bf16.gmra.mrb[0].mxu0 %v300
  %v1468 = vpop.f32.mrb[0].mxu0
  %v1469 = vadd.f32 %v272, %v1468
  %v1470 = vpop.f32.mrb[0].mxu0
  %v1471 = vadd.f32 %v276, %v1470
  %v1472 = vpop.f32.mrb[0].mxu0
  %v1473 = vpop.f32.mrb[0].mxu0
  %1474 = vdwg.mxu0
  %1475 = vmatprep.subr.bf16.mxu0 %v1051
  %1476 = vmatpush1.bf16.msra.mxu0 %v1050
  %1477 = vmatprep.subr.bf16.mxu0 %v1055
  %1478 = vmatpush1.bf16.msra.mxu0 %v1054
  %1479 = vmatprep.subr.bf16.mxu0 %v1059
  %1480 = vmatpush1.bf16.msra.mxu0 %v1058
  %1481 = vmatprep.subr.bf16.mxu0 %v1063
  %1482 = vmatpush1.bf16.msra.mxu0 %v1062
  %1483 = vmatprep.subr.bf16.mxu0 %v1067
  %1484 = vmatpush1.bf16.msra.mxu0 %v1066
  %1485 = vmatprep.subr.bf16.mxu0 %v1071
  %1486 = vmatpush1.bf16.msra.mxu0 %v1070
  %1487 = vmatprep.subr.bf16.mxu0 %v1075
  %1488 = vmatpush1.bf16.msra.mxu0 %v1074
  %1489 = vmatprep.subr.bf16.mxu0 %v1079
  %1490 = vmatpush1.bf16.msra.mxu0 %v1078
  %1491 = vmatprep.subr.bf16.mxu0 %v1083
  %1492 = vmatpush1.bf16.msra.mxu0 %v1082
  %1493 = vmatprep.subr.bf16.mxu0 %v1087
  %1494 = vmatpush1.bf16.msra.mxu0 %v1086
  %1495 = vmatprep.subr.bf16.mxu0 %v1091
  %1496 = vmatpush1.bf16.msra.mxu0 %v1090
  %1497 = vmatprep.subr.bf16.mxu0 %v1095
  %1498 = vmatpush1.bf16.msra.mxu0 %v1094
  %1499 = vmatprep.subr.bf16.mxu0 %v1099
  %1500 = vmatpush1.bf16.msra.mxu0 %v1098
  %1501 = vmatprep.subr.bf16.mxu0 %v1103
  %1502 = vmatpush1.bf16.msra.mxu0 %v1102
  %1503 = vmatprep.subr.bf16.mxu0 %v1107
  %1504 = vmatpush1.bf16.msra.mxu0 %v1106
  %1505 = vmatprep.subr.bf16.mxu0 %v1111
  %1506 = vmatpush1.bf16.msra.mxu0 %v1110
  %1507 = vmatprep.mubr.bf16.mxu0 %v303
  %1508 = vmatmul.mubr.bf16.gmra.mrb[0].mxu0 %v302
  %v1509 = vpop.f32.mrb[0].mxu0
  %v1510 = vadd.f32 %v1469, %v1509
  %v1511 = vpop.f32.mrb[0].mxu0
  %v1512 = vadd.f32 %v1471, %v1511
  %v1513 = vpop.f32.mrb[0].mxu0
  %v1514 = vpop.f32.mrb[0].mxu0
  %1515 = vdwg.mxu0
  %1516 = vmatprep.subr.bf16.mxu0 %v1115
  %1517 = vmatpush1.bf16.msra.mxu0 %v1114
  %1518 = vmatprep.subr.bf16.mxu0 %v1119
  %1519 = vmatpush1.bf16.msra.mxu0 %v1118
  %1520 = vmatprep.subr.bf16.mxu0 %v1123
  %1521 = vmatpush1.bf16.msra.mxu0 %v1122
  %1522 = vmatprep.subr.bf16.mxu0 %v1127
  %1523 = vmatpush1.bf16.msra.mxu0 %v1126
  %1524 = vmatprep.subr.bf16.mxu0 %v1131
  %1525 = vmatpush1.bf16.msra.mxu0 %v1130
  %1526 = vmatprep.subr.bf16.mxu0 %v1135
  %1527 = vmatpush1.bf16.msra.mxu0 %v1134
  %1528 = vmatprep.subr.bf16.mxu0 %v1139
  %1529 = vmatpush1.bf16.msra.mxu0 %v1138
  %1530 = vmatprep.subr.bf16.mxu0 %v1143
  %1531 = vmatpush1.bf16.msra.mxu0 %v1142
  %1532 = vmatprep.subr.bf16.mxu0 %v1147
  %1533 = vmatpush1.bf16.msra.mxu0 %v1146
  %1534 = vmatprep.subr.bf16.mxu0 %v1151
  %1535 = vmatpush1.bf16.msra.mxu0 %v1150
  %1536 = vmatprep.subr.bf16.mxu0 %v1155
  %1537 = vmatpush1.bf16.msra.mxu0 %v1154
  %1538 = vmatprep.subr.bf16.mxu0 %v1159
  %1539 = vmatpush1.bf16.msra.mxu0 %v1158
  %1540 = vmatprep.subr.bf16.mxu0 %v1163
  %1541 = vmatpush1.bf16.msra.mxu0 %v1162
  %1542 = vmatprep.subr.bf16.mxu0 %v1167
  %1543 = vmatpush1.bf16.msra.mxu0 %v1166
  %1544 = vmatprep.subr.bf16.mxu0 %v1171
  %1545 = vmatpush1.bf16.msra.mxu0 %v1170
  %1546 = vmatprep.subr.bf16.mxu0 %v1175
  %1547 = vmatpush1.bf16.msra.mxu0 %v1174
  %1548 = vmatprep.mubr.bf16.mxu0 %v305
  %1549 = vmatmul.mubr.bf16.gmra.mrb[0].mxu0 %v304
  %v1550 = vpop.f32.mrb[0].mxu0
  %v1551 = vadd.f32 %v1510, %v1550
  %v1552 = vpop.f32.mrb[0].mxu0
  %v1553 = vadd.f32 %v1512, %v1552
  %v1554 = vpop.f32.mrb[0].mxu0
  %v1555 = vpop.f32.mrb[0].mxu0
  %1556 = vdwg.mxu0
  %1557 = vmatprep.subr.bf16.mxu0 %v1179
  %1558 = vmatpush1.bf16.msra.mxu0 %v1178
  %1559 = vmatprep.subr.bf16.mxu0 %v1183
  %1560 = vmatpush1.bf16.msra.mxu0 %v1182
  %1561 = vmatprep.subr.bf16.mxu0 %v1187
  %1562 = vmatpush1.bf16.msra.mxu0 %v1186
  %1563 = vmatprep.subr.bf16.mxu0 %v1191
  %1564 = vmatpush1.bf16.msra.mxu0 %v1190
  %1565 = vmatprep.subr.bf16.mxu0 %v1195
  %1566 = vmatpush1.bf16.msra.mxu0 %v1194
  %1567 = vmatprep.subr.bf16.mxu0 %v1199
  %1568 = vmatpush1.bf16.msra.mxu0 %v1198
  %1569 = vmatprep.subr.bf16.mxu0 %v1203
  %1570 = vmatpush1.bf16.msra.mxu0 %v1202
  %1571 = vmatprep.subr.bf16.mxu0 %v1207
  %1572 = vmatpush1.bf16.msra.mxu0 %v1206
  %1573 = vmatprep.subr.bf16.mxu0 0
  %1574 = vmatpush1.bf16.msra.mxu0 0
  %1575 = vmatprep.subr.bf16.mxu0 0
  %1576 = vmatpush1.bf16.msra.mxu0 0
  %1577 = vmatprep.subr.bf16.mxu0 0
  %1578 = vmatpush1.bf16.msra.mxu0 0
  %1579 = vmatprep.subr.bf16.mxu0 0
  %1580 = vmatpush1.bf16.msra.mxu0 0
  %1581 = vmatprep.subr.bf16.mxu0 0
  %1582 = vmatpush1.bf16.msra.mxu0 0
  %1583 = vmatprep.subr.bf16.mxu0 0
  %1584 = vmatpush1.bf16.msra.mxu0 0
  %1585 = vmatprep.subr.bf16.mxu0 0
  %1586 = vmatpush1.bf16.msra.mxu0 0
  %1587 = vmatprep.subr.bf16.mxu0 0
  %1588 = vmatpush1.bf16.msra.mxu0 0
  %1589 = vmatprep.mubr.bf16.mxu0 0
  %1590 = vmatmul.mubr.bf16.gmra.mrb[0].mxu0 %v306
  %v1591 = vpop.f32.mrb[0].mxu0
  %v1592 = vadd.f32 %v1551, %v1591
  %v1593 = vpop.f32.mrb[0].mxu0
  %v1594 = vadd.f32 %v1553, %v1593
  %v1595 = vpop.f32.mrb[0].mxu0
  %v1596 = vpop.f32.mrb[0].mxu0
  %1597 = vdwg.mxu0
  %1598 = vmatprep.subr.bf16.mxu0 %v989
  %1599 = vmatpush1.bf16.msra.mxu0 %v988
  %1600 = vmatprep.subr.bf16.mxu0 %v993
  %1601 = vmatpush1.bf16.msra.mxu0 %v992
  %1602 = vmatprep.subr.bf16.mxu0 %v997
  %1603 = vmatpush1.bf16.msra.mxu0 %v996
  %1604 = vmatprep.subr.bf16.mxu0 %v1001
  %1605 = vmatpush1.bf16.msra.mxu0 %v1000
  %1606 = vmatprep.subr.bf16.mxu0 %v1005
  %1607 = vmatpush1.bf16.msra.mxu0 %v1004
  %1608 = vmatprep.subr.bf16.mxu0 %v1009
  %1609 = vmatpush1.bf16.msra.mxu0 %v1008
  %1610 = vmatprep.subr.bf16.mxu0 %v1013
  %1611 = vmatpush1.bf16.msra.mxu0 %v1012
  %1612 = vmatprep.subr.bf16.mxu0 %v1017
  %1613 = vmatpush1.bf16.msra.mxu0 %v1016
  %1614 = vmatprep.subr.bf16.mxu0 %v1021
  %1615 = vmatpush1.bf16.msra.mxu0 %v1020
  %1616 = vmatprep.subr.bf16.mxu0 %v1025
  %1617 = vmatpush1.bf16.msra.mxu0 %v1024
  %1618 = vmatprep.subr.bf16.mxu0 %v1029
  %1619 = vmatpush1.bf16.msra.mxu0 %v1028
  %1620 = vmatprep.subr.bf16.mxu0 %v1033
  %1621 = vmatpush1.bf16.msra.mxu0 %v1032
  %1622 = vmatprep.subr.bf16.mxu0 %v1037
  %1623 = vmatpush1.bf16.msra.mxu0 %v1036
  %1624 = vmatprep.subr.bf16.mxu0 %v1041
  %1625 = vmatpush1.bf16.msra.mxu0 %v1040
  %1626 = vmatprep.subr.bf16.mxu0 %v1045
  %1627 = vmatpush1.bf16.msra.mxu0 %v1044
  %1628 = vmatprep.subr.bf16.mxu0 %v1049
  %1629 = vmatpush1.bf16.msra.mxu0 %v1048
  %1630 = vmatprep.mubr.bf16.mxu0 %v301
  %1631 = vmatmul.mubr.bf16.gmra.mrb[0].mxu0 %v300
  %v1632 = vpop.f32.mrb[0].mxu0
  %v1633 = vadd.f32 %v280, %v1632
  %v1634 = vpop.f32.mrb[0].mxu0
  %v1635 = vadd.f32 %v284, %v1634
  %v1636 = vpop.f32.mrb[0].mxu0
  %v1637 = vpop.f32.mrb[0].mxu0
  %1638 = vdwg.mxu0
  %1639 = vmatprep.subr.bf16.mxu0 %v1053
  %1640 = vmatpush1.bf16.msra.mxu0 %v1052
  %1641 = vmatprep.subr.bf16.mxu0 %v1057
  %1642 = vmatpush1.bf16.msra.mxu0 %v1056
  %1643 = vmatprep.subr.bf16.mxu0 %v1061
  %1644 = vmatpush1.bf16.msra.mxu0 %v1060
  %1645 = vmatprep.subr.bf16.mxu0 %v1065
  %1646 = vmatpush1.bf16.msra.mxu0 %v1064
  %1647 = vmatprep.subr.bf16.mxu0 %v1069
  %1648 = vmatpush1.bf16.msra.mxu0 %v1068
  %1649 = vmatprep.subr.bf16.mxu0 %v1073
  %1650 = vmatpush1.bf16.msra.mxu0 %v1072
  %1651 = vmatprep.subr.bf16.mxu0 %v1077
  %1652 = vmatpush1.bf16.msra.mxu0 %v1076
  %1653 = vmatprep.subr.bf16.mxu0 %v1081
  %1654 = vmatpush1.bf16.msra.mxu0 %v1080
  %1655 = vmatprep.subr.bf16.mxu0 %v1085
  %1656 = vmatpush1.bf16.msra.mxu0 %v1084
  %1657 = vmatprep.subr.bf16.mxu0 %v1089
  %1658 = vmatpush1.bf16.msra.mxu0 %v1088
  %1659 = vmatprep.subr.bf16.mxu0 %v1093
  %1660 = vmatpush1.bf16.msra.mxu0 %v1092
  %1661 = vmatprep.subr.bf16.mxu0 %v1097
  %1662 = vmatpush1.bf16.msra.mxu0 %v1096
  %1663 = vmatprep.subr.bf16.mxu0 %v1101
  %1664 = vmatpush1.bf16.msra.mxu0 %v1100
  %1665 = vmatprep.subr.bf16.mxu0 %v1105
  %1666 = vmatpush1.bf16.msra.mxu0 %v1104
  %1667 = vmatprep.subr.bf16.mxu0 %v1109
  %1668 = vmatpush1.bf16.msra.mxu0 %v1108
  %1669 = vmatprep.subr.bf16.mxu0 %v1113
  %1670 = vmatpush1.bf16.msra.mxu0 %v1112
  %1671 = vmatprep.mubr.bf16.mxu0 %v303
  %1672 = vmatmul.mubr.bf16.gmra.mrb[0].mxu0 %v302
  %v1673 = vpop.f32.mrb[0].mxu0
  %v1674 = vadd.f32 %v1633, %v1673
  %v1675 = vpop.f32.mrb[0].mxu0
  %v1676 = vadd.f32 %v1635, %v1675
  %v1677 = vpop.f32.mrb[0].mxu0
  %v1678 = vpop.f32.mrb[0].mxu0
  %1679 = vdwg.mxu0
  %1680 = vmatprep.subr.bf16.mxu0 %v1117
  %1681 = vmatpush1.bf16.msra.mxu0 %v1116
  %1682 = vmatprep.subr.bf16.mxu0 %v1121
  %1683 = vmatpush1.bf16.msra.mxu0 %v1120
  %1684 = vmatprep.subr.bf16.mxu0 %v1125
  %1685 = vmatpush1.bf16.msra.mxu0 %v1124
  %1686 = vmatprep.subr.bf16.mxu0 %v1129
  %1687 = vmatpush1.bf16.msra.mxu0 %v1128
  %1688 = vmatprep.subr.bf16.mxu0 %v1133
  %1689 = vmatpush1.bf16.msra.mxu0 %v1132
  %1690 = vmatprep.subr.bf16.mxu0 %v1137
  %1691 = vmatpush1.bf16.msra.mxu0 %v1136
  %1692 = vmatprep.subr.bf16.mxu0 %v1141
  %1693 = vmatpush1.bf16.msra.mxu0 %v1140
  %1694 = vmatprep.subr.bf16.mxu0 %v1145
  %1695 = vmatpush1.bf16.msra.mxu0 %v1144
  %1696 = vmatprep.subr.bf16.mxu0 %v1149
  %1697 = vmatpush1.bf16.msra.mxu0 %v1148
  %1698 = vmatprep.subr.bf16.mxu0 %v1153
  %1699 = vmatpush1.bf16.msra.mxu0 %v1152
  %1700 = vmatprep.subr.bf16.mxu0 %v1157
  %1701 = vmatpush1.bf16.msra.mxu0 %v1156
  %1702 = vmatprep.subr.bf16.mxu0 %v1161
  %1703 = vmatpush1.bf16.msra.mxu0 %v1160
  %1704 = vmatprep.subr.bf16.mxu0 %v1165
  %1705 = vmatpush1.bf16.msra.mxu0 %v1164
  %1706 = vmatprep.subr.bf16.mxu0 %v1169
  %1707 = vmatpush1.bf16.msra.mxu0 %v1168
  %1708 = vmatprep.subr.bf16.mxu0 %v1173
  %1709 = vmatpush1.bf16.msra.mxu0 %v1172
  %1710 = vmatprep.subr.bf16.mxu0 %v1177
  %1711 = vmatpush1.bf16.msra.mxu0 %v1176
  %1712 = vmatprep.mubr.bf16.mxu0 %v305
  %1713 = vmatmul.mubr.bf16.gmra.mrb[0].mxu0 %v304
  %v1714 = vpop.f32.mrb[0].mxu0
  %v1715 = vadd.f32 %v1674, %v1714
  %v1716 = vpop.f32.mrb[0].mxu0
  %v1717 = vadd.f32 %v1676, %v1716
  %v1718 = vpop.f32.mrb[0].mxu0
  %v1719 = vpop.f32.mrb[0].mxu0
  %1720 = vdwg.mxu0
  %1721 = vmatprep.subr.bf16.mxu0 %v1181
  %1722 = vmatpush1.bf16.msra.mxu0 %v1180
  %1723 = vmatprep.subr.bf16.mxu0 %v1185
  %1724 = vmatpush1.bf16.msra.mxu0 %v1184
  %1725 = vmatprep.subr.bf16.mxu0 %v1189
  %1726 = vmatpush1.bf16.msra.mxu0 %v1188
  %1727 = vmatprep.subr.bf16.mxu0 %v1193
  %1728 = vmatpush1.bf16.msra.mxu0 %v1192
  %1729 = vmatprep.subr.bf16.mxu0 %v1197
  %1730 = vmatpush1.bf16.msra.mxu0 %v1196
  %1731 = vmatprep.subr.bf16.mxu0 %v1201
  %1732 = vmatpush1.bf16.msra.mxu0 %v1200
  %1733 = vmatprep.subr.bf16.mxu0 %v1205
  %1734 = vmatpush1.bf16.msra.mxu0 %v1204
  %1735 = vmatprep.subr.bf16.mxu0 %v1209
  %1736 = vmatpush1.bf16.msra.mxu0 %v1208
  %1737 = vmatprep.subr.bf16.mxu0 0
  %1738 = vmatpush1.bf16.msra.mxu0 0
  %1739 = vmatprep.subr.bf16.mxu0 0
  %1740 = vmatpush1.bf16.msra.mxu0 0
  %1741 = vmatprep.subr.bf16.mxu0 0
  %1742 = vmatpush1.bf16.msra.mxu0 0
  %1743 = vmatprep.subr.bf16.mxu0 0
  %1744 = vmatpush1.bf16.msra.mxu0 0
  %1745 = vmatprep.subr.bf16.mxu0 0
  %1746 = vmatpush1.bf16.msra.mxu0 0
  %1747 = vmatprep.subr.bf16.mxu0 0
  %1748 = vmatpush1.bf16.msra.mxu0 0
  %1749 = vmatprep.subr.bf16.mxu0 0
  %1750 = vmatpush1.bf16.msra.mxu0 0
  %1751 = vmatprep.subr.bf16.mxu0 0
  %1752 = vmatpush1.bf16.msra.mxu0 0
  %1753 = vmatprep.mubr.bf16.mxu0 0
  %1754 = vmatmul.mubr.bf16.gmra.mrb[0].mxu0 %v306
  %v1755 = vpop.f32.mrb[0].mxu0
  %v1756 = vadd.f32 %v1715, %v1755
  %v1757 = vpop.f32.mrb[0].mxu0
  %v1758 = vadd.f32 %v1717, %v1757
  %v1759 = vpop.f32.mrb[0].mxu0
  %v1760 = vpop.f32.mrb[0].mxu0
  %1761 = vdwg.mxu0
  %v1762 = vmax.f32 %v1592, 0.0
  %v1763 = vmax.f32 %v1594, 0.0
  %v1764 = vmax.f32 %v1756, 0.0
  %v1765 = vmax.f32 %v1758, 0.0
  %v1766 = vpack.c.bf16 %v1762, %v1762
  %v1767 = vpack.c.bf16 %v1763, %v1763
  %v1768 = vpack.c.bf16 %v1764, %v1764
  %v1769 = vpack.c.bf16 %v1765, %v1765
  %v1770 = vld [vmem:[%s3] sm:$0xff]
  %v1771 = vld [vmem:[%s3 + $0x8] sm:$0xff]
  %v1772 = vld [vmem:[%s3 + $0x10] sm:$0xff]
  %v1773 = vld [vmem:[%s3 + $0x18] sm:$0xff]
  %v1774 = vld [vmem:[%s3 + $0x20] sm:$0xff]
  %v1775 = vld [vmem:[%s3 + $0x28] sm:$0xff]
  %v1776 = vld [vmem:[%s3 + $0x30] sm:$0xff]
  %v1777 = vld [vmem:[%s3 + $0x38] sm:$0xff]
  %v1778 = vld [vmem:[%s3 + $0x40] sm:$0xff]
  %v1779 = vld [vmem:[%s3 + $0x48] sm:$0xff]
  %v1780 = vld [vmem:[%s3 + $0x50] sm:$0xff]
  %v1781 = vld [vmem:[%s3 + $0x58] sm:$0xff]
  %v1782 = vld [vmem:[%s3 + $0x60] sm:$0xff]
  %v1783 = vld [vmem:[%s3 + $0x68] sm:$0xff]
  %v1784 = vld [vmem:[%s3 + $0x70] sm:$0xff]
  %v1785 = vld [vmem:[%s3 + $0x78] sm:$0xff]
  %v1786 = vld [vmem:[%s3 + $0x80] sm:$0xff]
  %v1787 = vld [vmem:[%s3 + $0x88] sm:$0xff]
  %v1788 = vld [vmem:[%s3 + $0x90] sm:$0xff]
  %v1789 = vld [vmem:[%s3 + $0x98] sm:$0xff]
  %v1790 = vld [vmem:[%s3 + $0xa0] sm:$0xff]
  %v1791 = vld [vmem:[%s3 + $0xa8] sm:$0xff]
  %v1792 = vld [vmem:[%s3 + $0xb0] sm:$0xff]
  %v1793 = vld [vmem:[%s3 + $0xb8] sm:$0xff]
  %v1794 = vld [vmem:[%s3 + $0xc0] sm:$0xff]
  %v1795 = vld [vmem:[%s3 + $0xc8] sm:$0xff]
  %v1796 = vld [vmem:[%s3 + $0xd0] sm:$0xff]
  %v1797 = vld [vmem:[%s3 + $0xd8] sm:$0xff]
  %v1798 = vld [vmem:[%s3 + $0xe0] sm:$0xff]
  %v1799 = vld [vmem:[%s3 + $0xe8] sm:$0xff]
  %v1800 = vld [vmem:[%s3 + $0xf0] sm:$0xff]
  %v1801 = vld [vmem:[%s3 + $0xf8] sm:$0xff]
  %v1802 = vld [vmem:[%s3 + $0x100] sm:$0xff]
  %v1803 = vld [vmem:[%s3 + $0x108] sm:$0xff]
  %v1804 = vld [vmem:[%s3 + $0x110] sm:$0xff]
  %v1805 = vld [vmem:[%s3 + $0x118] sm:$0xff]
  %v1806 = vld [vmem:[%s3 + $0x120] sm:$0xff]
  %v1807 = vld [vmem:[%s3 + $0x128] sm:$0xff]
  %v1808 = vld [vmem:[%s3 + $0x130] sm:$0xff]
  %v1809 = vld [vmem:[%s3 + $0x138] sm:$0xff]
  %v1810 = vld [vmem:[%s3 + $0x140] sm:$0xff]
  %v1811 = vld [vmem:[%s3 + $0x148] sm:$0xff]
  %v1812 = vld [vmem:[%s3 + $0x150] sm:$0xff]
  %v1813 = vld [vmem:[%s3 + $0x158] sm:$0xff]
  %v1814 = vld [vmem:[%s3 + $0x160] sm:$0xff]
  %v1815 = vld [vmem:[%s3 + $0x168] sm:$0xff]
  %v1816 = vld [vmem:[%s3 + $0x170] sm:$0xff]
  %v1817 = vld [vmem:[%s3 + $0x178] sm:$0xff]
  %v1818 = vld [vmem:[%s3 + $0x180] sm:$0xff]
  %v1819 = vld [vmem:[%s3 + $0x188] sm:$0xff]
  %v1820 = vld [vmem:[%s3 + $0x190] sm:$0xff]
  %v1821 = vld [vmem:[%s3 + $0x198] sm:$0xff]
  %v1822 = vld [vmem:[%s3 + $0x1a0] sm:$0xff]
  %v1823 = vld [vmem:[%s3 + $0x1a8] sm:$0xff]
  %v1824 = vld [vmem:[%s3 + $0x1b0] sm:$0xff]
  %v1825 = vld [vmem:[%s3 + $0x1b8] sm:$0xff]
  %v1826 = vld [vmem:[%s3 + $0x1c0] sm:$0xff]
  %v1827 = vld [vmem:[%s3 + $0x1c8] sm:$0xff]
  %v1828 = vld [vmem:[%s3 + $0x1d0] sm:$0xff]
  %v1829 = vld [vmem:[%s3 + $0x1d8] sm:$0xff]
  %v1830 = vld [vmem:[%s3 + $0x1e0] sm:$0xff]
  %v1831 = vld [vmem:[%s3 + $0x1e8] sm:$0xff]
  %v1832 = vld [vmem:[%s3 + $0x1f0] sm:$0xff]
  %v1833 = vld [vmem:[%s3 + $0x1f8] sm:$0xff]
  %v1834 = vld [vmem:[%s4] sm:$0x3]
  %v1836 = vlaneseq
  %v1837 = vshrl.u32 %v1836, 7
  %v1838 = vsub.s32 0, %v1837
  %v1839 = vrot.slane %v1834, %v1838
  %v1840 = vlaneseq
  %v1841 = vshrl.u32 %v1840, 7
  %v1842 = vsub.s32 1, %v1841
  %v1843 = vrot.slane %v1834, %v1842
  %v1910 = vunpack.c.l.b16 %v1770
  %v1911 = vunpack.c.h.b16 %v1770
  %v1912 = vunpack.c.l.b16 %v1771
  %v1913 = vunpack.c.h.b16 %v1771
  %v1914 = vunpack.c.l.b16 %v1772
  %v1915 = vunpack.c.h.b16 %v1772
  %v1916 = vunpack.c.l.b16 %v1773
  %v1917 = vunpack.c.h.b16 %v1773
  %v1918 = vunpack.c.l.b16 %v1774
  %v1919 = vunpack.c.h.b16 %v1774
  %v1920 = vunpack.c.l.b16 %v1775
  %v1921 = vunpack.c.h.b16 %v1775
  %v1922 = vunpack.c.l.b16 %v1776
  %v1923 = vunpack.c.h.b16 %v1776
  %v1924 = vunpack.c.l.b16 %v1777
  %v1925 = vunpack.c.h.b16 %v1777
  %v1926 = vunpack.c.l.b16 %v1778
  %v1927 = vunpack.c.h.b16 %v1778
  %v1928 = vunpack.c.l.b16 %v1779
  %v1929 = vunpack.c.h.b16 %v1779
  %v1930 = vunpack.c.l.b16 %v1780
  %v1931 = vunpack.c.h.b16 %v1780
  %v1932 = vunpack.c.l.b16 %v1781
  %v1933 = vunpack.c.h.b16 %v1781
  %v1934 = vunpack.c.l.b16 %v1782
  %v1935 = vunpack.c.h.b16 %v1782
  %v1936 = vunpack.c.l.b16 %v1783
  %v1937 = vunpack.c.h.b16 %v1783
  %v1938 = vunpack.c.l.b16 %v1784
  %v1939 = vunpack.c.h.b16 %v1784
  %v1940 = vunpack.c.l.b16 %v1785
  %v1941 = vunpack.c.h.b16 %v1785
  %v1942 = vunpack.c.l.b16 %v1786
  %v1943 = vunpack.c.h.b16 %v1786
  %v1944 = vunpack.c.l.b16 %v1787
  %v1945 = vunpack.c.h.b16 %v1787
  %v1946 = vunpack.c.l.b16 %v1788
  %v1947 = vunpack.c.h.b16 %v1788
  %v1948 = vunpack.c.l.b16 %v1789
  %v1949 = vunpack.c.h.b16 %v1789
  %v1950 = vunpack.c.l.b16 %v1790
  %v1951 = vunpack.c.h.b16 %v1790
  %v1952 = vunpack.c.l.b16 %v1791
  %v1953 = vunpack.c.h.b16 %v1791
  %v1954 = vunpack.c.l.b16 %v1792
  %v1955 = vunpack.c.h.b16 %v1792
  %v1956 = vunpack.c.l.b16 %v1793
  %v1957 = vunpack.c.h.b16 %v1793
  %v1958 = vunpack.c.l.b16 %v1794
  %v1959 = vunpack.c.h.b16 %v1794
  %v1960 = vunpack.c.l.b16 %v1795
  %v1961 = vunpack.c.h.b16 %v1795
  %v1962 = vunpack.c.l.b16 %v1796
  %v1963 = vunpack.c.h.b16 %v1796
  %v1964 = vunpack.c.l.b16 %v1797
  %v1965 = vunpack.c.h.b16 %v1797
  %v1966 = vunpack.c.l.b16 %v1798
  %v1967 = vunpack.c.h.b16 %v1798
  %v1968 = vunpack.c.l.b16 %v1799
  %v1969 = vunpack.c.h.b16 %v1799
  %v1970 = vunpack.c.l.b16 %v1800
  %v1971 = vunpack.c.h.b16 %v1800
  %v1972 = vunpack.c.l.b16 %v1801
  %v1973 = vunpack.c.h.b16 %v1801
  %v1974 = vunpack.c.l.b16 %v1802
  %v1975 = vunpack.c.h.b16 %v1802
  %v1976 = vunpack.c.l.b16 %v1803
  %v1977 = vunpack.c.h.b16 %v1803
  %v1978 = vunpack.c.l.b16 %v1804
  %v1979 = vunpack.c.h.b16 %v1804
  %v1980 = vunpack.c.l.b16 %v1805
  %v1981 = vunpack.c.h.b16 %v1805
  %v1982 = vunpack.c.l.b16 %v1806
  %v1983 = vunpack.c.h.b16 %v1806
  %v1984 = vunpack.c.l.b16 %v1807
  %v1985 = vunpack.c.h.b16 %v1807
  %v1986 = vunpack.c.l.b16 %v1808
  %v1987 = vunpack.c.h.b16 %v1808
  %v1988 = vunpack.c.l.b16 %v1809
  %v1989 = vunpack.c.h.b16 %v1809
  %v1990 = vunpack.c.l.b16 %v1810
  %v1991 = vunpack.c.h.b16 %v1810
  %v1992 = vunpack.c.l.b16 %v1811
  %v1993 = vunpack.c.h.b16 %v1811
  %v1994 = vunpack.c.l.b16 %v1812
  %v1995 = vunpack.c.h.b16 %v1812
  %v1996 = vunpack.c.l.b16 %v1813
  %v1997 = vunpack.c.h.b16 %v1813
  %v1998 = vunpack.c.l.b16 %v1814
  %v1999 = vunpack.c.h.b16 %v1814
  %v2000 = vunpack.c.l.b16 %v1815
  %v2001 = vunpack.c.h.b16 %v1815
  %v2002 = vunpack.c.l.b16 %v1816
  %v2003 = vunpack.c.h.b16 %v1816
  %v2004 = vunpack.c.l.b16 %v1817
  %v2005 = vunpack.c.h.b16 %v1817
  %v2006 = vunpack.c.l.b16 %v1818
  %v2007 = vunpack.c.h.b16 %v1818
  %v2008 = vunpack.c.l.b16 %v1819
  %v2009 = vunpack.c.h.b16 %v1819
  %v2010 = vunpack.c.l.b16 %v1820
  %v2011 = vunpack.c.h.b16 %v1820
  %v2012 = vunpack.c.l.b16 %v1821
  %v2013 = vunpack.c.h.b16 %v1821
  %v2014 = vunpack.c.l.b16 %v1822
  %v2015 = vunpack.c.h.b16 %v1822
  %v2016 = vunpack.c.l.b16 %v1823
  %v2017 = vunpack.c.h.b16 %v1823
  %v2018 = vunpack.c.l.b16 %v1824
  %v2019 = vunpack.c.h.b16 %v1824
  %v2020 = vunpack.c.l.b16 %v1825
  %v2021 = vunpack.c.h.b16 %v1825
  %v2022 = vunpack.c.l.b16 %v1826
  %v2023 = vunpack.c.h.b16 %v1826
  %v2024 = vunpack.c.l.b16 %v1827
  %v2025 = vunpack.c.h.b16 %v1827
  %v2026 = vunpack.c.l.b16 %v1828
  %v2027 = vunpack.c.h.b16 %v1828
  %v2028 = vunpack.c.l.b16 %v1829
  %v2029 = vunpack.c.h.b16 %v1829
  %v2030 = vunpack.c.l.b16 %v1830
  %v2031 = vunpack.c.h.b16 %v1830
  %v2032 = vunpack.c.l.b16 %v1831
  %v2033 = vunpack.c.h.b16 %v1831
  %v2034 = vunpack.c.l.b16 %v1832
  %v2035 = vunpack.c.h.b16 %v1832
  %v2036 = vunpack.c.l.b16 %v1833
  %v2037 = vunpack.c.h.b16 %v1833
  %v2038 = vpack.c.b16 %v1912, %v1910
  %v2039 = vpack.c.b16 %v1913, %v1911
  %v2040 = vpack.c.b16 %v1916, %v1914
  %v2041 = vpack.c.b16 %v1917, %v1915
  %v2042 = vpack.c.b16 %v1920, %v1918
  %v2043 = vpack.c.b16 %v1921, %v1919
  %v2044 = vpack.c.b16 %v1924, %v1922
  %v2045 = vpack.c.b16 %v1925, %v1923
  %v2046 = vpack.c.b16 %v1928, %v1926
  %v2047 = vpack.c.b16 %v1929, %v1927
  %v2048 = vpack.c.b16 %v1932, %v1930
  %v2049 = vpack.c.b16 %v1933, %v1931
  %v2050 = vpack.c.b16 %v1936, %v1934
  %v2051 = vpack.c.b16 %v1937, %v1935
  %v2052 = vpack.c.b16 %v1940, %v1938
  %v2053 = vpack.c.b16 %v1941, %v1939
  %v2054 = vpack.c.b16 %v1944, %v1942
  %v2055 = vpack.c.b16 %v1945, %v1943
  %v2056 = vpack.c.b16 %v1948, %v1946
  %v2057 = vpack.c.b16 %v1949, %v1947
  %v2058 = vpack.c.b16 %v1952, %v1950
  %v2059 = vpack.c.b16 %v1953, %v1951
  %v2060 = vpack.c.b16 %v1956, %v1954
  %v2061 = vpack.c.b16 %v1957, %v1955
  %v2062 = vpack.c.b16 %v1960, %v1958
  %v2063 = vpack.c.b16 %v1961, %v1959
  %v2064 = vpack.c.b16 %v1964, %v1962
  %v2065 = vpack.c.b16 %v1965, %v1963
  %v2066 = vpack.c.b16 %v1968, %v1966
  %v2067 = vpack.c.b16 %v1969, %v1967
  %v2068 = vpack.c.b16 %v1972, %v1970
  %v2069 = vpack.c.b16 %v1973, %v1971
  %v2070 = vpack.c.b16 %v1976, %v1974
  %v2071 = vpack.c.b16 %v1977, %v1975
  %v2072 = vpack.c.b16 %v1980, %v1978
  %v2073 = vpack.c.b16 %v1981, %v1979
  %v2074 = vpack.c.b16 %v1984, %v1982
  %v2075 = vpack.c.b16 %v1985, %v1983
  %v2076 = vpack.c.b16 %v1988, %v1986
  %v2077 = vpack.c.b16 %v1989, %v1987
  %v2078 = vpack.c.b16 %v1992, %v1990
  %v2079 = vpack.c.b16 %v1993, %v1991
  %v2080 = vpack.c.b16 %v1996, %v1994
  %v2081 = vpack.c.b16 %v1997, %v1995
  %v2082 = vpack.c.b16 %v2000, %v1998
  %v2083 = vpack.c.b16 %v2001, %v1999
  %v2084 = vpack.c.b16 %v2004, %v2002
  %v2085 = vpack.c.b16 %v2005, %v2003
  %v2086 = vpack.c.b16 %v2008, %v2006
  %v2087 = vpack.c.b16 %v2009, %v2007
  %v2088 = vpack.c.b16 %v2012, %v2010
  %v2089 = vpack.c.b16 %v2013, %v2011
  %v2090 = vpack.c.b16 %v2016, %v2014
  %v2091 = vpack.c.b16 %v2017, %v2015
  %v2092 = vpack.c.b16 %v2020, %v2018
  %v2093 = vpack.c.b16 %v2021, %v2019
  %v2094 = vpack.c.b16 %v2024, %v2022
  %v2095 = vpack.c.b16 %v2025, %v2023
  %v2096 = vpack.c.b16 %v2028, %v2026
  %v2097 = vpack.c.b16 %v2029, %v2027
  %v2098 = vpack.c.b16 %v2032, %v2030
  %v2099 = vpack.c.b16 %v2033, %v2031
  %v2100 = vpack.c.b16 %v2036, %v2034
  %v2101 = vpack.c.b16 %v2037, %v2035
  %2166 = vmatprep.subr.bf16.mxu0 %v2039
  %2167 = vmatpush1.bf16.msra.mxu0 %v2038
  %2168 = vmatprep.subr.bf16.mxu0 %v2041
  %2169 = vmatpush1.bf16.msra.mxu0 %v2040
  %2170 = vmatprep.subr.bf16.mxu0 %v2043
  %2171 = vmatpush1.bf16.msra.mxu0 %v2042
  %2172 = vmatprep.subr.bf16.mxu0 %v2045
  %2173 = vmatpush1.bf16.msra.mxu0 %v2044
  %2174 = vmatprep.subr.bf16.mxu0 %v2047
  %2175 = vmatpush1.bf16.msra.mxu0 %v2046
  %2176 = vmatprep.subr.bf16.mxu0 %v2049
  %2177 = vmatpush1.bf16.msra.mxu0 %v2048
  %2178 = vmatprep.subr.bf16.mxu0 %v2051
  %2179 = vmatpush1.bf16.msra.mxu0 %v2050
  %2180 = vmatprep.subr.bf16.mxu0 %v2053
  %2181 = vmatpush1.bf16.msra.mxu0 %v2052
  %2182 = vmatprep.subr.bf16.mxu0 %v2055
  %2183 = vmatpush1.bf16.msra.mxu0 %v2054
  %2184 = vmatprep.subr.bf16.mxu0 %v2057
  %2185 = vmatpush1.bf16.msra.mxu0 %v2056
  %2186 = vmatprep.subr.bf16.mxu0 %v2059
  %2187 = vmatpush1.bf16.msra.mxu0 %v2058
  %2188 = vmatprep.subr.bf16.mxu0 %v2061
  %2189 = vmatpush1.bf16.msra.mxu0 %v2060
  %2190 = vmatprep.subr.bf16.mxu0 %v2063
  %2191 = vmatpush1.bf16.msra.mxu0 %v2062
  %2192 = vmatprep.subr.bf16.mxu0 %v2065
  %2193 = vmatpush1.bf16.msra.mxu0 %v2064
  %2194 = vmatprep.subr.bf16.mxu0 %v2067
  %2195 = vmatpush1.bf16.msra.mxu0 %v2066
  %2196 = vmatprep.subr.bf16.mxu0 %v2069
  %2197 = vmatpush1.bf16.msra.mxu0 %v2068
  %2198 = vmatprep.mubr.bf16.mxu0 %v1767
  %2199 = vmatmul.mubr.bf16.gmra.mrb[0].mxu0 %v1766
  %v2200 = vpop.f32.mrb[0].mxu0
  %v2201 = vadd.f32 %v1839, %v2200
  %v2202 = vpop.f32.mrb[0].mxu0
  %v2203 = vadd.f32 %v1843, %v2202
  %v2204 = vpop.f32.mrb[0].mxu0
  %v2205 = vpop.f32.mrb[0].mxu0
  %2206 = vdwg.mxu0
  %2207 = vmatprep.subr.bf16.mxu0 %v2071
  %2208 = vmatpush1.bf16.msra.mxu0 %v2070
  %2209 = vmatprep.subr.bf16.mxu0 %v2073
  %2210 = vmatpush1.bf16.msra.mxu0 %v2072
  %2211 = vmatprep.subr.bf16.mxu0 %v2075
  %2212 = vmatpush1.bf16.msra.mxu0 %v2074
  %2213 = vmatprep.subr.bf16.mxu0 %v2077
  %2214 = vmatpush1.bf16.msra.mxu0 %v2076
  %2215 = vmatprep.subr.bf16.mxu0 %v2079
  %2216 = vmatpush1.bf16.msra.mxu0 %v2078
  %2217 = vmatprep.subr.bf16.mxu0 %v2081
  %2218 = vmatpush1.bf16.msra.mxu0 %v2080
  %2219 = vmatprep.subr.bf16.mxu0 %v2083
  %2220 = vmatpush1.bf16.msra.mxu0 %v2082
  %2221 = vmatprep.subr.bf16.mxu0 %v2085
  %2222 = vmatpush1.bf16.msra.mxu0 %v2084
  %2223 = vmatprep.subr.bf16.mxu0 %v2087
  %2224 = vmatpush1.bf16.msra.mxu0 %v2086
  %2225 = vmatprep.subr.bf16.mxu0 %v2089
  %2226 = vmatpush1.bf16.msra.mxu0 %v2088
  %2227 = vmatprep.subr.bf16.mxu0 %v2091
  %2228 = vmatpush1.bf16.msra.mxu0 %v2090
  %2229 = vmatprep.subr.bf16.mxu0 %v2093
  %2230 = vmatpush1.bf16.msra.mxu0 %v2092
  %2231 = vmatprep.subr.bf16.mxu0 %v2095
  %2232 = vmatpush1.bf16.msra.mxu0 %v2094
  %2233 = vmatprep.subr.bf16.mxu0 %v2097
  %2234 = vmatpush1.bf16.msra.mxu0 %v2096
  %2235 = vmatprep.subr.bf16.mxu0 %v2099
  %2236 = vmatpush1.bf16.msra.mxu0 %v2098
  %2237 = vmatprep.subr.bf16.mxu0 %v2101
  %2238 = vmatpush1.bf16.msra.mxu0 %v2100
  %2239 = vmatprep.mubr.bf16.mxu0 %v1769
  %2240 = vmatmul.mubr.bf16.gmra.mrb[0].mxu0 %v1768
  %v2241 = vpop.f32.mrb[0].mxu0
  %v2242 = vadd.f32 %v2201, %v2241
  %v2243 = vpop.f32.mrb[0].mxu0
  %v2244 = vadd.f32 %v2203, %v2243
  %v2245 = vpop.f32.mrb[0].mxu0
  %v2246 = vpop.f32.mrb[0].mxu0
  %2247 = vdwg.mxu0
  %v2248 = vmax.f32 %v2242, 0.0
  %v2249 = vmax.f32 %v2244, 0.0
  %v2250 = vpack.c.bf16 %v2248, %v2248
  %v2251 = vpack.c.bf16 %v2249, %v2249
  %v2252 = vld [vmem:[%s5] sm:$0xff]
  %v2253 = vld [vmem:[%s5 + $0x8] sm:$0xff]
  %v2254 = vld [vmem:[%s5 + $0x10] sm:$0xff]
  %v2255 = vld [vmem:[%s5 + $0x18] sm:$0xff]
  %v2256 = vld [vmem:[%s5 + $0x20] sm:$0xff]
  %v2257 = vld [vmem:[%s5 + $0x28] sm:$0xff]
  %v2258 = vld [vmem:[%s5 + $0x30] sm:$0xff]
  %v2259 = vld [vmem:[%s5 + $0x38] sm:$0xff]
  %v2260 = vld [vmem:[%s5 + $0x40] sm:$0xff]
  %v2261 = vld [vmem:[%s5 + $0x48] sm:$0xff]
  %v2262 = vld [vmem:[%s5 + $0x50] sm:$0xff]
  %v2263 = vld [vmem:[%s5 + $0x58] sm:$0xff]
  %v2264 = vld [vmem:[%s5 + $0x60] sm:$0xff]
  %v2265 = vld [vmem:[%s5 + $0x68] sm:$0xff]
  %v2266 = vld [vmem:[%s5 + $0x70] sm:$0xff]
  %v2267 = vld [vmem:[%s5 + $0x78] sm:$0xff]
  %v2268 = vld [vmem:[%s5 + $0x80] sm:$0xff]
  %v2269 = vld [vmem:[%s5 + $0x88] sm:$0xff]
  %v2270 = vld [vmem:[%s5 + $0x90] sm:$0xff]
  %v2271 = vld [vmem:[%s5 + $0x98] sm:$0xff]
  %v2272 = vld [vmem:[%s5 + $0xa0] sm:$0xff]
  %v2273 = vld [vmem:[%s5 + $0xa8] sm:$0xff]
  %v2274 = vld [vmem:[%s5 + $0xb0] sm:$0xff]
  %v2275 = vld [vmem:[%s5 + $0xb8] sm:$0xff]
  %v2276 = vld [vmem:[%s5 + $0xc0] sm:$0xff]
  %v2277 = vld [vmem:[%s5 + $0xc8] sm:$0xff]
  %v2278 = vld [vmem:[%s5 + $0xd0] sm:$0xff]
  %v2279 = vld [vmem:[%s5 + $0xd8] sm:$0xff]
  %v2280 = vld [vmem:[%s5 + $0xe0] sm:$0xff]
  %v2281 = vld [vmem:[%s5 + $0xe8] sm:$0xff]
  %v2282 = vld [vmem:[%s5 + $0xf0] sm:$0xff]
  %v2283 = vld [vmem:[%s5 + $0xf8] sm:$0xff]
  %v2284 = vld [vmem:[%s6] sm:$0x3]
  %v2286 = vlaneseq
  %v2287 = vshrl.u32 %v2286, 7
  %v2288 = vsub.s32 0, %v2287
  %v2289 = vrot.slane %v2284, %v2288
  %v2290 = vlaneseq
  %v2291 = vshrl.u32 %v2290, 7
  %v2292 = vsub.s32 1, %v2291
  %v2293 = vrot.slane %v2284, %v2292
  %v2328 = vunpack.c.l.b16 %v2252
  %v2329 = vunpack.c.h.b16 %v2252
  %v2330 = vunpack.c.l.b16 %v2253
  %v2331 = vunpack.c.h.b16 %v2253
  %v2332 = vunpack.c.l.b16 %v2254
  %v2333 = vunpack.c.h.b16 %v2254
  %v2334 = vunpack.c.l.b16 %v2255
  %v2335 = vunpack.c.h.b16 %v2255
  %v2336 = vunpack.c.l.b16 %v2256
  %v2337 = vunpack.c.h.b16 %v2256
  %v2338 = vunpack.c.l.b16 %v2257
  %v2339 = vunpack.c.h.b16 %v2257
  %v2340 = vunpack.c.l.b16 %v2258
  %v2341 = vunpack.c.h.b16 %v2258
  %v2342 = vunpack.c.l.b16 %v2259
  %v2343 = vunpack.c.h.b16 %v2259
  %v2344 = vunpack.c.l.b16 %v2260
  %v2345 = vunpack.c.h.b16 %v2260
  %v2346 = vunpack.c.l.b16 %v2261
  %v2347 = vunpack.c.h.b16 %v2261
  %v2348 = vunpack.c.l.b16 %v2262
  %v2349 = vunpack.c.h.b16 %v2262
  %v2350 = vunpack.c.l.b16 %v2263
  %v2351 = vunpack.c.h.b16 %v2263
  %v2352 = vunpack.c.l.b16 %v2264
  %v2353 = vunpack.c.h.b16 %v2264
  %v2354 = vunpack.c.l.b16 %v2265
  %v2355 = vunpack.c.h.b16 %v2265
  %v2356 = vunpack.c.l.b16 %v2266
  %v2357 = vunpack.c.h.b16 %v2266
  %v2358 = vunpack.c.l.b16 %v2267
  %v2359 = vunpack.c.h.b16 %v2267
  %v2360 = vunpack.c.l.b16 %v2268
  %v2361 = vunpack.c.h.b16 %v2268
  %v2362 = vunpack.c.l.b16 %v2269
  %v2363 = vunpack.c.h.b16 %v2269
  %v2364 = vunpack.c.l.b16 %v2270
  %v2365 = vunpack.c.h.b16 %v2270
  %v2366 = vunpack.c.l.b16 %v2271
  %v2367 = vunpack.c.h.b16 %v2271
  %v2368 = vunpack.c.l.b16 %v2272
  %v2369 = vunpack.c.h.b16 %v2272
  %v2370 = vunpack.c.l.b16 %v2273
  %v2371 = vunpack.c.h.b16 %v2273
  %v2372 = vunpack.c.l.b16 %v2274
  %v2373 = vunpack.c.h.b16 %v2274
  %v2374 = vunpack.c.l.b16 %v2275
  %v2375 = vunpack.c.h.b16 %v2275
  %v2376 = vunpack.c.l.b16 %v2276
  %v2377 = vunpack.c.h.b16 %v2276
  %v2378 = vunpack.c.l.b16 %v2277
  %v2379 = vunpack.c.h.b16 %v2277
  %v2380 = vunpack.c.l.b16 %v2278
  %v2381 = vunpack.c.h.b16 %v2278
  %v2382 = vunpack.c.l.b16 %v2279
  %v2383 = vunpack.c.h.b16 %v2279
  %v2384 = vunpack.c.l.b16 %v2280
  %v2385 = vunpack.c.h.b16 %v2280
  %v2386 = vunpack.c.l.b16 %v2281
  %v2387 = vunpack.c.h.b16 %v2281
  %v2388 = vunpack.c.l.b16 %v2282
  %v2389 = vunpack.c.h.b16 %v2282
  %v2390 = vunpack.c.l.b16 %v2283
  %v2391 = vunpack.c.h.b16 %v2283
  %v2392 = vpack.c.b16 %v2330, %v2328
  %v2393 = vpack.c.b16 %v2331, %v2329
  %v2394 = vpack.c.b16 %v2334, %v2332
  %v2395 = vpack.c.b16 %v2335, %v2333
  %v2396 = vpack.c.b16 %v2338, %v2336
  %v2397 = vpack.c.b16 %v2339, %v2337
  %v2398 = vpack.c.b16 %v2342, %v2340
  %v2399 = vpack.c.b16 %v2343, %v2341
  %v2400 = vpack.c.b16 %v2346, %v2344
  %v2401 = vpack.c.b16 %v2347, %v2345
  %v2402 = vpack.c.b16 %v2350, %v2348
  %v2403 = vpack.c.b16 %v2351, %v2349
  %v2404 = vpack.c.b16 %v2354, %v2352
  %v2405 = vpack.c.b16 %v2355, %v2353
  %v2406 = vpack.c.b16 %v2358, %v2356
  %v2407 = vpack.c.b16 %v2359, %v2357
  %v2408 = vpack.c.b16 %v2362, %v2360
  %v2409 = vpack.c.b16 %v2363, %v2361
  %v2410 = vpack.c.b16 %v2366, %v2364
  %v2411 = vpack.c.b16 %v2367, %v2365
  %v2412 = vpack.c.b16 %v2370, %v2368
  %v2413 = vpack.c.b16 %v2371, %v2369
  %v2414 = vpack.c.b16 %v2374, %v2372
  %v2415 = vpack.c.b16 %v2375, %v2373
  %v2416 = vpack.c.b16 %v2378, %v2376
  %v2417 = vpack.c.b16 %v2379, %v2377
  %v2418 = vpack.c.b16 %v2382, %v2380
  %v2419 = vpack.c.b16 %v2383, %v2381
  %v2420 = vpack.c.b16 %v2386, %v2384
  %v2421 = vpack.c.b16 %v2387, %v2385
  %v2422 = vpack.c.b16 %v2390, %v2388
  %v2423 = vpack.c.b16 %v2391, %v2389
  %2456 = vmatprep.subr.bf16.mxu0 %v2393
  %2457 = vmatpush1.bf16.msra.mxu0 %v2392
  %2458 = vmatprep.subr.bf16.mxu0 %v2395
  %2459 = vmatpush1.bf16.msra.mxu0 %v2394
  %2460 = vmatprep.subr.bf16.mxu0 %v2397
  %2461 = vmatpush1.bf16.msra.mxu0 %v2396
  %2462 = vmatprep.subr.bf16.mxu0 %v2399
  %2463 = vmatpush1.bf16.msra.mxu0 %v2398
  %2464 = vmatprep.subr.bf16.mxu0 %v2401
  %2465 = vmatpush1.bf16.msra.mxu0 %v2400
  %2466 = vmatprep.subr.bf16.mxu0 %v2403
  %2467 = vmatpush1.bf16.msra.mxu0 %v2402
  %2468 = vmatprep.subr.bf16.mxu0 %v2405
  %2469 = vmatpush1.bf16.msra.mxu0 %v2404
  %2470 = vmatprep.subr.bf16.mxu0 %v2407
  %2471 = vmatpush1.bf16.msra.mxu0 %v2406
  %2472 = vmatprep.subr.bf16.mxu0 %v2409
  %2473 = vmatpush1.bf16.msra.mxu0 %v2408
  %2474 = vmatprep.subr.bf16.mxu0 %v2411
  %2475 = vmatpush1.bf16.msra.mxu0 %v2410
  %2476 = vmatprep.subr.bf16.mxu0 %v2413
  %2477 = vmatpush1.bf16.msra.mxu0 %v2412
  %2478 = vmatprep.subr.bf16.mxu0 %v2415
  %2479 = vmatpush1.bf16.msra.mxu0 %v2414
  %2480 = vmatprep.subr.bf16.mxu0 %v2417
  %2481 = vmatpush1.bf16.msra.mxu0 %v2416
  %2482 = vmatprep.subr.bf16.mxu0 %v2419
  %2483 = vmatpush1.bf16.msra.mxu0 %v2418
  %2484 = vmatprep.subr.bf16.mxu0 %v2421
  %2485 = vmatpush1.bf16.msra.mxu0 %v2420
  %2486 = vmatprep.subr.bf16.mxu0 %v2423
  %2487 = vmatpush1.bf16.msra.mxu0 %v2422
  %2488 = vmatprep.mubr.bf16.mxu0 %v2251
  %2489 = vmatmul.mubr.bf16.gmra.mrb[0].mxu0 %v2250
  %v2490 = vpop.f32.mrb[0].mxu0
  %v2491 = vadd.f32 %v2289, %v2490
  %v2492 = vpop.f32.mrb[0].mxu0
  %v2493 = vadd.f32 %v2293, %v2492
  %v2494 = vpop.f32.mrb[0].mxu0
  %v2495 = vpop.f32.mrb[0].mxu0
  %2496 = vdwg.mxu0
  %v2497 = vmax.f32 %v2491, 0.0
  %v2498 = vmax.f32 %v2493, 0.0
  %v2499 = vpack.c.bf16 %v2497, %v2497
  %v2500 = vpack.c.bf16 %v2498, %v2498
  %v2501 = vld [vmem:[%s7] sm:$0xf]
  %v2502 = vld [vmem:[%s7 + $0x4] sm:$0xf]
  %v2503 = vld [vmem:[%s7 + $0x8] sm:$0xf]
  %v2504 = vld [vmem:[%s7 + $0xc] sm:$0xf]
  %v2505 = vld [vmem:[%s7 + $0x10] sm:$0xf]
  %v2506 = vld [vmem:[%s7 + $0x14] sm:$0xf]
  %v2507 = vld [vmem:[%s7 + $0x18] sm:$0xf]
  %v2508 = vld [vmem:[%s7 + $0x1c] sm:$0xf]
  %v2509 = vld [vmem:[%s7 + $0x20] sm:$0xf]
  %v2510 = vld [vmem:[%s7 + $0x24] sm:$0xf]
  %v2511 = vld [vmem:[%s7 + $0x28] sm:$0xf]
  %v2512 = vld [vmem:[%s7 + $0x2c] sm:$0xf]
  %v2513 = vld [vmem:[%s7 + $0x30] sm:$0xf]
  %v2514 = vld [vmem:[%s7 + $0x34] sm:$0xf]
  %v2515 = vld [vmem:[%s7 + $0x38] sm:$0xf]
  %v2516 = vld [vmem:[%s7 + $0x3c] sm:$0xf]
  %v2517 = vld [vmem:[%s7 + $0x40] sm:$0xf]
  %v2518 = vld [vmem:[%s7 + $0x44] sm:$0xf]
  %v2519 = vld [vmem:[%s7 + $0x48] sm:$0xf]
  %v2520 = vld [vmem:[%s7 + $0x4c] sm:$0xf]
  %v2521 = vld [vmem:[%s7 + $0x50] sm:$0xf]
  %v2522 = vld [vmem:[%s7 + $0x54] sm:$0xf]
  %v2523 = vld [vmem:[%s7 + $0x58] sm:$0xf]
  %v2524 = vld [vmem:[%s7 + $0x5c] sm:$0xf]
  %v2525 = vld [vmem:[%s7 + $0x60] sm:$0xf]
  %v2526 = vld [vmem:[%s7 + $0x64] sm:$0xf]
  %v2527 = vld [vmem:[%s7 + $0x68] sm:$0xf]
  %v2528 = vld [vmem:[%s7 + $0x6c] sm:$0xf]
  %v2529 = vld [vmem:[%s7 + $0x70] sm:$0xf]
  %v2530 = vld [vmem:[%s7 + $0x74] sm:$0xf]
  %v2531 = vld [vmem:[%s7 + $0x78] sm:$0xf]
  %v2532 = vld [vmem:[%s7 + $0x7c] sm:$0xf]
  %v2533 = vld [vmem:[%s8] sm:$0x1]
  %v2535 = vlaneseq
  %v2536 = vshrl.u32 %v2535, 7
  %v2537 = vsub.s32 0, %v2536
  %v2538 = vrot.slane %v2533, %v2537
  %v2572 = vunpack.c.l.b16 %v2501
  %v2573 = vunpack.c.l.b16 %v2502
  %v2574 = vunpack.c.l.b16 %v2503
  %v2575 = vunpack.c.l.b16 %v2504
  %v2576 = vunpack.c.l.b16 %v2505
  %v2577 = vunpack.c.l.b16 %v2506
  %v2578 = vunpack.c.l.b16 %v2507
  %v2579 = vunpack.c.l.b16 %v2508
  %v2580 = vunpack.c.l.b16 %v2509
  %v2581 = vunpack.c.l.b16 %v2510
  %v2582 = vunpack.c.l.b16 %v2511
  %v2583 = vunpack.c.l.b16 %v2512
  %v2584 = vunpack.c.l.b16 %v2513
  %v2585 = vunpack.c.l.b16 %v2514
  %v2586 = vunpack.c.l.b16 %v2515
  %v2587 = vunpack.c.l.b16 %v2516
  %v2588 = vunpack.c.l.b16 %v2517
  %v2589 = vunpack.c.l.b16 %v2518
  %v2590 = vunpack.c.l.b16 %v2519
  %v2591 = vunpack.c.l.b16 %v2520
  %v2592 = vunpack.c.l.b16 %v2521
  %v2593 = vunpack.c.l.b16 %v2522
  %v2594 = vunpack.c.l.b16 %v2523
  %v2595 = vunpack.c.l.b16 %v2524
  %v2596 = vunpack.c.l.b16 %v2525
  %v2597 = vunpack.c.l.b16 %v2526
  %v2598 = vunpack.c.l.b16 %v2527
  %v2599 = vunpack.c.l.b16 %v2528
  %v2600 = vunpack.c.l.b16 %v2529
  %v2601 = vunpack.c.l.b16 %v2530
  %v2602 = vunpack.c.l.b16 %v2531
  %v2603 = vunpack.c.l.b16 %v2532
  %v2604 = vpack.c.b16 %v2573, %v2572
  %v2605 = vpack.c.b16 %v2575, %v2574
  %v2606 = vpack.c.b16 %v2577, %v2576
  %v2607 = vpack.c.b16 %v2579, %v2578
  %v2608 = vpack.c.b16 %v2581, %v2580
  %v2609 = vpack.c.b16 %v2583, %v2582
  %v2610 = vpack.c.b16 %v2585, %v2584
  %v2611 = vpack.c.b16 %v2587, %v2586
  %v2612 = vpack.c.b16 %v2589, %v2588
  %v2613 = vpack.c.b16 %v2591, %v2590
  %v2614 = vpack.c.b16 %v2593, %v2592
  %v2615 = vpack.c.b16 %v2595, %v2594
  %v2616 = vpack.c.b16 %v2597, %v2596
  %v2617 = vpack.c.b16 %v2599, %v2598
  %v2618 = vpack.c.b16 %v2601, %v2600
  %v2619 = vpack.c.b16 %v2603, %v2602
  %2636 = vmatprep.subr.bf16.mxu0 0
  %2637 = vmatpush1.bf16.msra.mxu0 %v2604
  %2638 = vmatprep.subr.bf16.mxu0 0
  %2639 = vmatpush1.bf16.msra.mxu0 %v2605
  %2640 = vmatprep.subr.bf16.mxu0 0
  %2641 = vmatpush1.bf16.msra.mxu0 %v2606
  %2642 = vmatprep.subr.bf16.mxu0 0
  %2643 = vmatpush1.bf16.msra.mxu0 %v2607
  %2644 = vmatprep.subr.bf16.mxu0 0
  %2645 = vmatpush1.bf16.msra.mxu0 %v2608
  %2646 = vmatprep.subr.bf16.mxu0 0
  %2647 = vmatpush1.bf16.msra.mxu0 %v2609
  %2648 = vmatprep.subr.bf16.mxu0 0
  %2649 = vmatpush1.bf16.msra.mxu0 %v2610
  %2650 = vmatprep.subr.bf16.mxu0 0
  %2651 = vmatpush1.bf16.msra.mxu0 %v2611
  %2652 = vmatprep.subr.bf16.mxu0 0
  %2653 = vmatpush1.bf16.msra.mxu0 %v2612
  %2654 = vmatprep.subr.bf16.mxu0 0
  %2655 = vmatpush1.bf16.msra.mxu0 %v2613
  %2656 = vmatprep.subr.bf16.mxu0 0
  %2657 = vmatpush1.bf16.msra.mxu0 %v2614
  %2658 = vmatprep.subr.bf16.mxu0 0
  %2659 = vmatpush1.bf16.msra.mxu0 %v2615
  %2660 = vmatprep.subr.bf16.mxu0 0
  %2661 = vmatpush1.bf16.msra.mxu0 %v2616
  %2662 = vmatprep.subr.bf16.mxu0 0
  %2663 = vmatpush1.bf16.msra.mxu0 %v2617
  %2664 = vmatprep.subr.bf16.mxu0 0
  %2665 = vmatpush1.bf16.msra.mxu0 %v2618
  %2666 = vmatprep.subr.bf16.mxu0 0
  %2667 = vmatpush1.bf16.msra.mxu0 %v2619
  %2668 = vmatprep.mubr.bf16.mxu0 %v2500
  %2669 = vmatmul.mubr.bf16.gmra.mrb[0].mxu0 %v2499
  %v2670 = vpop.f32.mrb[0].mxu0
  %v2671 = vadd.f32 %v2538, %v2670
  %v2672 = vpop.f32.mrb[0].mxu0
  %v2673 = vpop.f32.mrb[0].mxu0
  %v2674 = vpop.f32.mrb[0].mxu0
  %2675 = vdwg.mxu0
  %v2676 = vmax.f32 %v2671, 0.0
  %v2677 = vpack.c.bf16 %v2676, %v2676
  %v2678 = vld [vmem:[%s9] sm:$0xf]
  %v2679 = vld [vmem:[%s9 + $0x4] sm:$0xf]
  %v2680 = vld [vmem:[%s9 + $0x8] sm:$0xf]
  %v2681 = vld [vmem:[%s9 + $0xc] sm:$0xf]
  %v2682 = vld [vmem:[%s9 + $0x10] sm:$0xf]
  %v2683 = vld [vmem:[%s9 + $0x14] sm:$0xf]
  %v2684 = vld [vmem:[%s9 + $0x18] sm:$0xf]
  %v2685 = vld [vmem:[%s9 + $0x1c] sm:$0xf]
  %v2686 = vld [vmem:[%s9 + $0x20] sm:$0xf]
  %v2687 = vld [vmem:[%s9 + $0x24] sm:$0xf]
  %v2688 = vld [vmem:[%s9 + $0x28] sm:$0xf]
  %v2689 = vld [vmem:[%s9 + $0x2c] sm:$0xf]
  %v2690 = vld [vmem:[%s9 + $0x30] sm:$0xf]
  %v2691 = vld [vmem:[%s9 + $0x34] sm:$0xf]
  %v2692 = vld [vmem:[%s9 + $0x38] sm:$0xf]
  %v2693 = vld [vmem:[%s9 + $0x3c] sm:$0xf]
  %v2694 = vld [vmem:[%s10] sm:$0x1]
  %v2696 = vlaneseq
  %v2697 = vshrl.u32 %v2696, 7
  %v2698 = vsub.s32 0, %v2697
  %v2699 = vrot.slane %v2694, %v2698
  %v2717 = vunpack.c.l.b16 %v2678
  %v2718 = vunpack.c.l.b16 %v2679
  %v2719 = vunpack.c.l.b16 %v2680
  %v2720 = vunpack.c.l.b16 %v2681
  %v2721 = vunpack.c.l.b16 %v2682
  %v2722 = vunpack.c.l.b16 %v2683
  %v2723 = vunpack.c.l.b16 %v2684
  %v2724 = vunpack.c.l.b16 %v2685
  %v2725 = vunpack.c.l.b16 %v2686
  %v2726 = vunpack.c.l.b16 %v2687
  %v2727 = vunpack.c.l.b16 %v2688
  %v2728 = vunpack.c.l.b16 %v2689
  %v2729 = vunpack.c.l.b16 %v2690
  %v2730 = vunpack.c.l.b16 %v2691
  %v2731 = vunpack.c.l.b16 %v2692
  %v2732 = vunpack.c.l.b16 %v2693
  %v2733 = vpack.c.b16 %v2718, %v2717
  %v2734 = vpack.c.b16 %v2720, %v2719
  %v2735 = vpack.c.b16 %v2722, %v2721
  %v2736 = vpack.c.b16 %v2724, %v2723
  %v2737 = vpack.c.b16 %v2726, %v2725
  %v2738 = vpack.c.b16 %v2728, %v2727
  %v2739 = vpack.c.b16 %v2730, %v2729
  %v2740 = vpack.c.b16 %v2732, %v2731
  %2749 = vmatprep.subr.bf16.mxu0 0
  %2750 = vmatpush1.bf16.msra.mxu0 %v2733
  %2751 = vmatprep.subr.bf16.mxu0 0
  %2752 = vmatpush1.bf16.msra.mxu0 %v2734
  %2753 = vmatprep.subr.bf16.mxu0 0
  %2754 = vmatpush1.bf16.msra.mxu0 %v2735
  %2755 = vmatprep.subr.bf16.mxu0 0
  %2756 = vmatpush1.bf16.msra.mxu0 %v2736
  %2757 = vmatprep.subr.bf16.mxu0 0
  %2758 = vmatpush1.bf16.msra.mxu0 %v2737
  %2759 = vmatprep.subr.bf16.mxu0 0
  %2760 = vmatpush1.bf16.msra.mxu0 %v2738
  %2761 = vmatprep.subr.bf16.mxu0 0
  %2762 = vmatpush1.bf16.msra.mxu0 %v2739
  %2763 = vmatprep.subr.bf16.mxu0 0
  %2764 = vmatpush1.bf16.msra.mxu0 %v2740
  %2765 = vmatprep.subr.bf16.mxu0 0
  %2766 = vmatpush1.bf16.msra.mxu0 0
  %2767 = vmatprep.subr.bf16.mxu0 0
  %2768 = vmatpush1.bf16.msra.mxu0 0
  %2769 = vmatprep.subr.bf16.mxu0 0
  %2770 = vmatpush1.bf16.msra.mxu0 0
  %2771 = vmatprep.subr.bf16.mxu0 0
  %2772 = vmatpush1.bf16.msra.mxu0 0
  %2773 = vmatprep.subr.bf16.mxu0 0
  %2774 = vmatpush1.bf16.msra.mxu0 0
  %2775 = vmatprep.subr.bf16.mxu0 0
  %2776 = vmatpush1.bf16.msra.mxu0 0
  %2777 = vmatprep.subr.bf16.mxu0 0
  %2778 = vmatpush1.bf16.msra.mxu0 0
  %2779 = vmatprep.subr.bf16.mxu0 0
  %2780 = vmatpush1.bf16.msra.mxu0 0
  %2781 = vmatprep.mubr.bf16.mxu0 0
  %2782 = vmatmul.mubr.bf16.gmra.mrb[0].mxu0 %v2677
  %v2783 = vpop.f32.mrb[0].mxu0
  %v2784 = vadd.f32 %v2699, %v2783
  %v2785 = vpop.f32.mrb[0].mxu0
  %v2786 = vpop.f32.mrb[0].mxu0
  %v2787 = vpop.f32.mrb[0].mxu0
  %2788 = vdwg.mxu0
  %2789 = vst [vmem:[%s11] sm:$0xff] %v2784
  // Predicated region
  $region46: #{base_network_forward.1} parent=0 // pred_check
    _
  $region47: #{base_network_forward.1} parent=0 // pred_check_branch
    %2791 = sbr.rel (0) target = $region49
  $region48: #{base_network_forward.1} parent=0 // pred_region
    _
  $region49: #{base_network_forward.1} parent=0 // pred_fallthru
    _
  // Predicated region
  $region50: #{base_network_forward.1} parent=0 // pred_check
    _
  $region51: #{base_network_forward.1} parent=0 // pred_check_branch
    %2793 = sbr.rel (0) target = $region53
  $region52: #{base_network_forward.1} parent=0 // pred_region
    _
  $region53: #{base_network_forward.1} parent=0 // pred_fallthru
    _

</llo_original>
